<compile_context>
chip_gen: v7x
topology: tpu7x:2x2x1
jax: 0.10.0
libtpu: 0.0.40
codegen_flags: <defaults>
</compile_context>

<pallas_src>
import functools

import jax
import jax.numpy as jnp
from jax.experimental import pallas as pl
from jax.experimental.pallas import tpu as pltpu

ALPHA = 1e-4   # module default alpha
BETA = 70.0    # module default beta


# ---------------------------------------------------------------------------
# helpers
# ---------------------------------------------------------------------------
def _round_up(x, m):
    return ((x + m - 1) // m) * m


def _default_vmem_limit():
    # Explicit scoped-VMEM limit (defaults: 16 MiB v5e, 32 MiB v6e/v7x).  Use
    # ~3/4 of physical VMEM (128 MiB v5e/v6e, 64 MiB v7x) with a safe fallback.
    try:
        cap = pltpu.get_tpu_info().vmem_capacity_bytes
    except Exception:
        cap = 64 * 1024 * 1024
    return int(cap) * 3 // 4


def _choose_batch_tile(B, TF, budget):
    # Per-step VMEM (double-buffered): images f32 + bf16 (x_adv, clean) out
    # blocks scale with tb; mask/delta/TV-mask (1, TF) f32 inputs are fixed.
    def fits(tb):
        return 16 * tb * TF + 32 * TF <= budget
    if fits(B):
        return B
    cands = [tb for tb in range(8, B, 8) if B % tb == 0]
    for tb in sorted(cands, reverse=True):
        if fits(tb):
            return tb
    # TODO(synk): cdiv + masked tail tile for ragged batch sizes.
    return cands[0] if cands else B


def _choose_k_tiling(f, tk_cap):
    # Choose (tk, nk_half, f_pad) with tk a multiple of 128 and the grid
    # (2, nk_half) covering f_pad = 2*nk_half*tk >= f.  Prefer an exact tiling
    # (no padding) near the requested cap; otherwise fall back to a padded
    # tail tile so tile choice never depends on f's factorization.
    tk_cap = max(128, (tk_cap // 128) * 128)
    nk_half0 = max(1, pl.cdiv(f, 2 * tk_cap))
    for nk_half in range(nk_half0, nk_half0 + 9):
        if f % (2 * nk_half) == 0 and (f // (2 * nk_half)) % 128 == 0:
            return f // (2 * nk_half), nk_half, f
    nk_half = nk_half0
    tk = _round_up(pl.cdiv(f, 2 * nk_half), 128)
    return tk, nk_half, 2 * nk_half * tk


# ---------------------------------------------------------------------------
# Encoder precompute (hoisted out of the hot path / attack loop).
# (x - mean)/std @ W  ==  x @ (W * (1/std per feature))  +  (-mean/std) @ W
# ---------------------------------------------------------------------------
def prepare_encoder(enc_w, norm_mean, norm_std, image_hw):
    F, D = enc_w.shape
    Dp = max(128, _round_up(D, 128))                      # pad D to 128 lanes
    scale_f = jnp.repeat(1.0 / norm_std, image_hw)        # [F], NCHW order
    shift_f = jnp.repeat(-norm_mean / norm_std, image_hw)  # [F]
    bias = (shift_f @ enc_w).astype(jnp.float32)          # [D] (f32 precision)
    w_eff = (enc_w * scale_f[:, None]).astype(jnp.bfloat16)
    w_eff = jnp.pad(w_eff, ((0, 0), (0, Dp - D)))
    bias = jnp.pad(bias, (0, Dp - D)).reshape(1, Dp)
    return w_eff, bias


# ---------------------------------------------------------------------------
# Kernel 1: patch blend + clamp, bf16 LHS emit (x_adv | clean), L1 + TV
# partials.  Grid (channel-tile t [parallel], batch-tile b [arbitrary]).
# ---------------------------------------------------------------------------
def _patch_kernel(images_ref, mask_p_ref, delta_p_ref, w_ok_ref, h_ok_ref,
                  lhs_ref, l1_ref, tv_ref, *, W, inv_chw):
    mask = (jnp.tanh(mask_p_ref[...]) + 1.0) * 0.5        # (1, TF)
    delta = (jnp.tanh(delta_p_ref[...]) + 1.0) * 0.5      # (1, TF)
    x = images_ref[...]                                   # (TB, TF) f32

    x_adv = jnp.clip(delta * mask + (1.0 - mask) * x, 0.0, 1.0)
    # bf16 activation stream for the encoder: slab 0 = adversarial, 1 = clean.
    lhs_ref[0, :, :] = x_adv.astype(lhs_ref.dtype)
    lhs_ref[1, :, :] = x.astype(lhs_ref.dtype)

    # L1/TV depend only on mask/delta (batch-independent): compute once per
    # channel tile (first batch step); the (1,128) partial block stays
    # resident across the batch sweep and is written back when t changes.
    @pl.when(pl.program_id(1) == 0)
    def _():
        TF = mask.shape[-1]

        # TODO(synk): sublane-dense (H, W) TV layout would cut XLU work ~8x;
        # kept in the proven flat layout since kernel 1 is HBM-bound.
        def _tv(v):
            d_w = pltpu.roll(v, TF - 1, 1) - v             # v[f+1] - v[f]
            d_h = pltpu.roll(v, TF - W, 1) - v             # v[f+W] - v[f]
            return (jnp.sum(d_w * d_w * w_ok_ref[...], keepdims=True) +
                    jnp.sum(d_h * d_h * h_ok_ref[...], keepdims=True))

        dl1 = jnp.sum(jnp.abs(mask), keepdims=True)                  # (1, 1)
        dtv = (_tv(mask) + _tv(delta)) * inv_chw                     # (1, 1)
        l1_ref[...] = jnp.zeros_like(l1_ref) + dl1     # lane-dense broadcast
        tv_ref[...] = jnp.zeros_like(tv_ref) + dtv


# ---------------------------------------------------------------------------
# Kernel 2: bf16 encoder matmul, K-tiled over F; ONE dot per K tile for the
# concatenated (adv | clean) LHS.  Grid (core c [parallel], k [arbitrary]):
# each core accumulates its own f32 partial (summed in the wrapper).
# ---------------------------------------------------------------------------
def _encode_kernel(lhs_ref, w_ref, part_ref):
    @pl.when(pl.program_id(1) == 0)
    def _():
        part_ref[...] = jnp.zeros_like(part_ref)
    acc = jnp.dot(lhs_ref[...], w_ref[...], preferred_element_type=jnp.float32)
    part_ref[...] += acc.reshape(part_ref.shape)


# ---------------------------------------------------------------------------
# Wrapper
# ---------------------------------------------------------------------------
def patch_attack_forward(images, mask_param, delta_param, w_eff, bias,
                         alpha=ALPHA, beta=BETA, tile_k=8192,
                         vmem_limit_bytes=None):
    B, C, H, W = images.shape
    HW = H * W
    F = C * HW
    Fw, Dp = w_eff.shape
    assert Fw == F and Dp % 128 == 0

    if vmem_limit_bytes is None:
        vmem_limit_bytes = _default_vmem_limit()
    budget = int(vmem_limit_bytes * 0.8)

    # Free row-major views (NCHW order preserved).
    images_flat = images.reshape(B, F)
    mask_flat = mask_param.reshape(1, F)
    delta_flat = delta_param.reshape(1, F)

    # --- Kernel 1 tiling ---------------------------------------------------
    if HW % 128 == 0:
        TF = HW                       # channel-aligned tile
    else:
        TF = F                        # TODO(synk): pad-to-128 channel tiling
    nT = F // TF
    TB = _choose_batch_tile(B, TF, budget)
    nB = B // TB

    # TV boundary masks, precomputed once (constant index_map -> loaded once).
    pos = jnp.arange(TF, dtype=jnp.int32)
    w_okf = ((pos % W) != (W - 1)).astype(jnp.float32).reshape(1, TF)
    h_okf = ((pos % HW) < (HW - W)).astype(jnp.float32).reshape(1, TF)

    k1 = functools.partial(_patch_kernel, W=W, inv_chw=1.0 / float(C * HW))
    lhs, l1_row, tv_row = pl.pallas_call(
        k1,
        grid=(nT, nB),
        in_specs=[
            pl.BlockSpec((TB, TF), lambda t, b: (b, t)),
            pl.BlockSpec((1, TF), lambda t, b: (0, t)),
            pl.BlockSpec((1, TF), lambda t, b: (0, t)),
            pl.BlockSpec((1, TF), lambda t, b: (0, 0)),
            pl.BlockSpec((1, TF), lambda t, b: (0, 0)),
        ],
        out_specs=[
            pl.BlockSpec((2, TB, TF), lambda t, b: (0, b, t)),
            pl.BlockSpec((1, 128), lambda t, b: (0, t)),
            pl.BlockSpec((1, 128), lambda t, b: (0, t)),
        ],
        out_shape=[
            jax.ShapeDtypeStruct((2, B, F), jnp.bfloat16),   # [adv | clean]
            jax.ShapeDtypeStruct((1, nT * 128), jnp.float32),
            jax.ShapeDtypeStruct((1, nT * 128), jnp.float32),
        ],
        compiler_params=pltpu.CompilerParams(
            dimension_semantics=("parallel", "arbitrary"),
            vmem_limit_bytes=vmem_limit_bytes),
    )(images_flat, mask_flat, delta_flat, w_okf, h_okf)

    l1_s = jnp.sum(l1_row.reshape(nT, 128)[:, 0])
    tv_s = jnp.sum(tv_row.reshape(nT, 128)[:, 0])

    # --- Kernel 2 tiling (large K tiles sized against the VMEM budget) ------
    fixed = 2 * (2 * B) * Dp * 4                      # f32 partial out blocks
    per_tk = 2 * ((2 * B) * 2 + Dp * 2)               # bf16 lhs + weight / lane
    tk_cap = max(128, ((budget - fixed) // per_tk) // 128 * 128)
    tk_req = max(128, min(_round_up(tile_k, 128), tk_cap))
    tk, nk_half, f_pad = _choose_k_tiling(F, tk_req)

    lhs2 = lhs.reshape(2 * B, F)
    w_k = w_eff
    if f_pad > F:
        # Rare path (F with no convenient 128-aligned tiling): zero padding
        # contributes 0 to the dot.  TODO(synk): hoist the weight pad into
        # prepare_encoder for the production attack loop.
        lhs2 = jnp.pad(lhs2, ((0, 0), (0, f_pad - F)))
        w_k = jnp.pad(w_eff, ((0, f_pad - F), (0, 0)))

    # NOTE: if profiling shows exposed DMA gaps, bump the weight BlockSpec to
    # pipeline_mode=pl.Buffered(3); the larger tk is usually sufficient.
    partials = pl.pallas_call(
        _encode_kernel,
        grid=(2, nk_half),
        in_specs=[
            pl.BlockSpec((2 * B, tk), lambda c, k: (0, c * nk_half + k)),
            pl.BlockSpec((tk, Dp), lambda c, k: (c * nk_half + k, 0)),
        ],
        out_specs=pl.BlockSpec((1, 2 * B, Dp), lambda c, k: (c, 0, 0)),
        out_shape=jax.ShapeDtypeStruct((2, 2 * B, Dp), jnp.float32),
        compiler_params=pltpu.CompilerParams(
            dimension_semantics=("parallel", "arbitrary"),
            vmem_limit_bytes=vmem_limit_bytes),
    )(lhs2, w_k)

    # --- Tiny epilogue: bias (folded normalization), L2-norm, cosine --------
    # TODO(synk): in a real attack loop the clean-image features are constants
    # and would be precomputed once outside the loop.
    feats = partials.sum(axis=0) + bias               # (2B, Dp)
    fa, fc = feats[:B], feats[B:]
    fa = fa * jax.lax.rsqrt(jnp.sum(fa * fa, axis=1, keepdims=True) + 1e-12)
    fc = fc * jax.lax.rsqrt(jnp.sum(fc * fc, axis=1, keepdims=True) + 1e-12)
    cos_loss = jnp.sum(fa * fc, axis=1)               # (B,)

    # Reference: norm = l1 + tv; loss = cos + alpha*norm + beta*tv
    # (tv intentionally appears in both terms, exactly as in the PyTorch code).
    norm = l1_s + tv_s
    loss = jnp.mean(cos_loss + alpha * norm + beta * tv_s)

    return {"loss": loss, "cos_loss": cos_loss.mean(), "tv": tv_s, "l1": l1_s}


if __name__ == "__main__":
    key = jax.random.PRNGKey(0)
    B, C, H, W, D = 2, 3, 16, 16, 32
    k1, k2, k3, k4 = jax.random.split(key, 4)

    images = jax.random.uniform(k1, (B, C, H, W), jnp.float32, 0.0, 1.0)
    # nn.Parameter init: uniform_(-0.5, 0.5) on [1, 3, image_size, image_size]
    mask_param = jax.random.uniform(k2, (1, C, H, W), jnp.float32, -0.5, 0.5)
    delta_param = jax.random.uniform(k3, (1, C, H, W), jnp.float32, -0.5, 0.5)

    # TODO(synk): model.encode_image / tokenizer are external CLIP components;
    # substituted with a deterministic linear image encoder (Pallas MXU matmul).
    enc_w = jax.random.normal(k4, (C * H * W, D), jnp.float32) * 0.02
    norm_mean = jnp.array([0.48145466, 0.4578275, 0.40821073], jnp.float32)
    norm_std = jnp.array([0.26862954, 0.26130258, 0.27577711], jnp.float32)

    # Folded/padded encoder weight + bias: constants of the attack loop,
    # computed once outside the jitted forward.
    w_eff, bias = prepare_encoder(enc_w, norm_mean, norm_std, H * W)

    fwd = jax.jit(patch_attack_forward)
    out = fwd(images, mask_param, delta_param, w_eff, bias)
    jax.block_until_ready(out)
    print("KERNEL_OK")
</pallas_src>

<mosaic_0001>
module attributes {stable_mosaic.version = 11 : i64} {
  func.func @_patch_kernel(%arg0: i32, %arg1: i32, %arg2: memref<2x256xf32, #tpu.memory_space<vmem>>, %arg3: memref<1x256xf32, #tpu.memory_space<vmem>>, %arg4: memref<1x256xf32, #tpu.memory_space<vmem>>, %arg5: memref<1x256xf32, #tpu.memory_space<vmem>>, %arg6: memref<1x256xf32, #tpu.memory_space<vmem>>, %arg7: memref<2x2x256xbf16, #tpu.memory_space<vmem>>, %arg8: memref<1x128xf32, #tpu.memory_space<vmem>>, %arg9: memref<1x128xf32, #tpu.memory_space<vmem>>) attributes {dimension_semantics = [#tpu.dimension_semantics<parallel>, #tpu.dimension_semantics<arbitrary>], iteration_bounds = array<i64: 3, 1>, scalar_prefetch = 0 : i64, scratch_operands = 0 : i64, tpu.core_type = #tpu.core_type<tc>, window_params = [{transform_indices = @transform_0, window_bounds = array<i64: 2, 256>}, {transform_indices = @transform_1, window_bounds = array<i64: 1, 256>}, {transform_indices = @transform_2, window_bounds = array<i64: 1, 256>}, {pipeline_mode = #tpu.pipeline_mode<synchronous>, transform_indices = @transform_3, window_bounds = array<i64: 1, 256>}, {pipeline_mode = #tpu.pipeline_mode<synchronous>, transform_indices = @transform_4, window_bounds = array<i64: 1, 256>}, {transform_indices = @transform_5, window_bounds = array<i64: 2, 2, 256>}, {transform_indices = @transform_6, window_bounds = array<i64: 1, 128>}, {transform_indices = @transform_7, window_bounds = array<i64: 1, 128>}]} {
    %c0 = arith.constant 0 : index
    %c0_0 = arith.constant 0 : index
    %0 = vector.load %arg3[%c0, %c0_0] : memref<1x256xf32, #tpu.memory_space<vmem>>, vector<1x256xf32>
    %1 = math.tanh %0 : vector<1x256xf32>
    %cst = arith.constant 1.000000e+00 : f32
    %2 = vector.broadcast %cst : f32 to vector<1x256xf32>
    %3 = arith.addf %1, %2 : vector<1x256xf32>
    %cst_1 = arith.constant 5.000000e-01 : f32
    %4 = vector.broadcast %cst_1 : f32 to vector<1x256xf32>
    %5 = arith.mulf %3, %4 : vector<1x256xf32>
    %c0_2 = arith.constant 0 : index
    %c0_3 = arith.constant 0 : index
    %6 = vector.load %arg4[%c0_2, %c0_3] : memref<1x256xf32, #tpu.memory_space<vmem>>, vector<1x256xf32>
    %7 = math.tanh %6 : vector<1x256xf32>
    %cst_4 = arith.constant 1.000000e+00 : f32
    %8 = vector.broadcast %cst_4 : f32 to vector<1x256xf32>
    %9 = arith.addf %7, %8 : vector<1x256xf32>
    %cst_5 = arith.constant 5.000000e-01 : f32
    %10 = vector.broadcast %cst_5 : f32 to vector<1x256xf32>
    %11 = arith.mulf %9, %10 : vector<1x256xf32>
    %c0_6 = arith.constant 0 : index
    %c0_7 = arith.constant 0 : index
    %12 = vector.load %arg2[%c0_6, %c0_7] : memref<2x256xf32, #tpu.memory_space<vmem>>, vector<2x256xf32>
    %13 = arith.mulf %11, %5 : vector<1x256xf32>
    %cst_8 = arith.constant 1.000000e+00 : f32
    %14 = vector.broadcast %cst_8 : f32 to vector<1x256xf32>
    %15 = arith.subf %14, %5 : vector<1x256xf32>
    %16 = vector.broadcast %15 : vector<1x256xf32> to vector<2x256xf32>
    %17 = arith.mulf %16, %12 : vector<2x256xf32>
    %18 = vector.broadcast %13 : vector<1x256xf32> to vector<2x256xf32>
    %19 = arith.addf %18, %17 : vector<2x256xf32>
    %cst_9 = arith.constant 0.000000e+00 : f32
    %cst_10 = arith.constant 1.000000e+00 : f32
    %20 = vector.broadcast %cst_9 : f32 to vector<2x256xf32>
    %21 = arith.maximumf %20, %19 : vector<2x256xf32>
    %22 = vector.broadcast %cst_10 : f32 to vector<2x256xf32>
    %23 = arith.minimumf %22, %21 : vector<2x256xf32>
    %24 = arith.truncf %23 : vector<2x256xf32> to vector<2x256xbf16>
    %c0_11 = arith.constant 0 : index
    %c0_12 = arith.constant 0 : index
    %c0_13 = arith.constant 0 : index
    %25 = vector.load %arg7[%c0_11, %c0_12, %c0_13] : memref<2x2x256xbf16, #tpu.memory_space<vmem>>, vector<1x2x256xbf16>
    %26 = vector.shape_cast %25 : vector<1x2x256xbf16> to vector<2x256xbf16>
    %27 = vector.shape_cast %24 : vector<2x256xbf16> to vector<1x2x256xbf16>
    tpu.vector_store %arg7[%c0_11, %c0_12, %c0_13], %27 {strides = array<i32>} : memref<2x2x256xbf16, #tpu.memory_space<vmem>>, vector<1x2x256xbf16>,
    %28 = arith.truncf %12 : vector<2x256xf32> to vector<2x256xbf16>
    %c1 = arith.constant 1 : index
    %c0_14 = arith.constant 0 : index
    %c0_15 = arith.constant 0 : index
    %29 = vector.load %arg7[%c1, %c0_14, %c0_15] : memref<2x2x256xbf16, #tpu.memory_space<vmem>>, vector<1x2x256xbf16>
    %30 = vector.shape_cast %29 : vector<1x2x256xbf16> to vector<2x256xbf16>
    %31 = vector.shape_cast %28 : vector<2x256xbf16> to vector<1x2x256xbf16>
    tpu.vector_store %arg7[%c1, %c0_14, %c0_15], %31 {strides = array<i32>} : memref<2x2x256xbf16, #tpu.memory_space<vmem>>, vector<1x2x256xbf16>,
    %c0_i32 = arith.constant 0 : i32
    %32 = arith.cmpi eq, %arg1, %c0_i32 : i32
    %33 = arith.extui %32 : i1 to i32
    %c0_i32_16 = arith.constant 0 : i32
    %34 = arith.cmpi ne, %33, %c0_i32_16 : i32
    scf.if %34 {
      %35 = math.absf %5 : vector<1x256xf32>
      %36 = vector.shape_cast %35 : vector<1x256xf32> to vector<1x1x256xf32>
      %cst_17 = arith.constant dense<0.000000e+00> : vector<1xf32>
      %37 = vector.multi_reduction <add>, %36, %cst_17 [1, 2] : vector<1x1x256xf32> to vector<1xf32>
      %38 = vector.shape_cast %37 : vector<1xf32> to vector<1x1x1xf32>
      %39 = vector.extract %38[0, 0, 0] : f32 from vector<1x1x1xf32>
      %40 = vector.broadcast %39 : f32 to vector<1x1xf32>
      %c255_i32 = arith.constant 255 : i32
      %41 = tpu.dynamic_rotate %5 by %c255_i32 dim 1 : vector<1x256xf32>, i32 -> vector<1x256xf32>
      %42 = arith.subf %41, %5 : vector<1x256xf32>
      %c240_i32 = arith.constant 240 : i32
      %43 = tpu.dynamic_rotate %5 by %c240_i32 dim 1 : vector<1x256xf32>, i32 -> vector<1x256xf32>
      %44 = arith.subf %43, %5 : vector<1x256xf32>
      %45 = arith.mulf %42, %42 : vector<1x256xf32>
      %c0_18 = arith.constant 0 : index
      %c0_19 = arith.constant 0 : index
      %46 = vector.load %arg5[%c0_18, %c0_19] : memref<1x256xf32, #tpu.memory_space<vmem>>, vector<1x256xf32>
      %47 = arith.mulf %45, %46 : vector<1x256xf32>
      %48 = vector.shape_cast %47 : vector<1x256xf32> to vector<1x1x256xf32>
      %cst_20 = arith.constant dense<0.000000e+00> : vector<1xf32>
      %49 = vector.multi_reduction <add>, %48, %cst_20 [1, 2] : vector<1x1x256xf32> to vector<1xf32>
      %50 = vector.shape_cast %49 : vector<1xf32> to vector<1x1x1xf32>
      %51 = vector.extract %50[0, 0, 0] : f32 from vector<1x1x1xf32>
      %52 = vector.broadcast %51 : f32 to vector<1x1xf32>
      %53 = arith.mulf %44, %44 : vector<1x256xf32>
      %c0_21 = arith.constant 0 : index
      %c0_22 = arith.constant 0 : index
      %54 = vector.load %arg6[%c0_21, %c0_22] : memref<1x256xf32, #tpu.memory_space<vmem>>, vector<1x256xf32>
      %55 = arith.mulf %53, %54 : vector<1x256xf32>
      %56 = vector.shape_cast %55 : vector<1x256xf32> to vector<1x1x256xf32>
      %cst_23 = arith.constant dense<0.000000e+00> : vector<1xf32>
      %57 = vector.multi_reduction <add>, %56, %cst_23 [1, 2] : vector<1x1x256xf32> to vector<1xf32>
      %58 = vector.shape_cast %57 : vector<1xf32> to vector<1x1x1xf32>
      %59 = vector.extract %58[0, 0, 0] : f32 from vector<1x1x1xf32>
      %60 = vector.broadcast %59 : f32 to vector<1x1xf32>
      %61 = arith.addf %52, %60 : vector<1x1xf32>
      %c255_i32_24 = arith.constant 255 : i32
      %62 = tpu.dynamic_rotate %11 by %c255_i32_24 dim 1 : vector<1x256xf32>, i32 -> vector<1x256xf32>
      %63 = arith.subf %62, %11 : vector<1x256xf32>
      %c240_i32_25 = arith.constant 240 : i32
      %64 = tpu.dynamic_rotate %11 by %c240_i32_25 dim 1 : vector<1x256xf32>, i32 -> vector<1x256xf32>
      %65 = arith.subf %64, %11 : vector<1x256xf32>
      %66 = arith.mulf %63, %63 : vector<1x256xf32>
      %c0_26 = arith.constant 0 : index
      %c0_27 = arith.constant 0 : index
      %67 = vector.load %arg5[%c0_26, %c0_27] : memref<1x256xf32, #tpu.memory_space<vmem>>, vector<1x256xf32>
      %68 = arith.mulf %66, %67 : vector<1x256xf32>
      %69 = vector.shape_cast %68 : vector<1x256xf32> to vector<1x1x256xf32>
      %cst_28 = arith.constant dense<0.000000e+00> : vector<1xf32>
      %70 = vector.multi_reduction <add>, %69, %cst_28 [1, 2] : vector<1x1x256xf32> to vector<1xf32>
      %71 = vector.shape_cast %70 : vector<1xf32> to vector<1x1x1xf32>
      %72 = vector.extract %71[0, 0, 0] : f32 from vector<1x1x1xf32>
      %73 = vector.broadcast %72 : f32 to vector<1x1xf32>
      %74 = arith.mulf %65, %65 : vector<1x256xf32>
      %c0_29 = arith.constant 0 : index
      %c0_30 = arith.constant 0 : index
      %75 = vector.load %arg6[%c0_29, %c0_30] : memref<1x256xf32, #tpu.memory_space<vmem>>, vector<1x256xf32>
      %76 = arith.mulf %74, %75 : vector<1x256xf32>
      %77 = vector.shape_cast %76 : vector<1x256xf32> to vector<1x1x256xf32>
      %cst_31 = arith.constant dense<0.000000e+00> : vector<1xf32>
      %78 = vector.multi_reduction <add>, %77, %cst_31 [1, 2] : vector<1x1x256xf32> to vector<1xf32>
      %79 = vector.shape_cast %78 : vector<1xf32> to vector<1x1x1xf32>
      %80 = vector.extract %79[0, 0, 0] : f32 from vector<1x1x1xf32>
      %81 = vector.broadcast %80 : f32 to vector<1x1xf32>
      %82 = arith.addf %73, %81 : vector<1x1xf32>
      %83 = arith.addf %61, %82 : vector<1x1xf32>
      %cst_32 = arith.constant 0.00130208337 : f32
      %84 = vector.broadcast %cst_32 : f32 to vector<1x1xf32>
      %85 = arith.mulf %83, %84 : vector<1x1xf32>
      %cst_33 = arith.constant 0.000000e+00 : f32
      %86 = vector.broadcast %cst_33 : f32 to vector<1x128xf32>
      %87 = vector.broadcast %40 : vector<1x1xf32> to vector<1x128xf32>
      %88 = arith.addf %86, %87 : vector<1x128xf32>
      %c0_34 = arith.constant 0 : index
      %c0_35 = arith.constant 0 : index
      %89 = vector.load %arg8[%c0_34, %c0_35] : memref<1x128xf32, #tpu.memory_space<vmem>>, vector<1x128xf32>
      tpu.vector_store %arg8[%c0_34, %c0_35], %88 {strides = array<i32>} : memref<1x128xf32, #tpu.memory_space<vmem>>, vector<1x128xf32>,
      %cst_36 = arith.constant 0.000000e+00 : f32
      %90 = vector.broadcast %cst_36 : f32 to vector<1x128xf32>
      %91 = vector.broadcast %85 : vector<1x1xf32> to vector<1x128xf32>
      %92 = arith.addf %90, %91 : vector<1x128xf32>
      %c0_37 = arith.constant 0 : index
      %c0_38 = arith.constant 0 : index
      %93 = vector.load %arg9[%c0_37, %c0_38] : memref<1x128xf32, #tpu.memory_space<vmem>>, vector<1x128xf32>
      tpu.vector_store %arg9[%c0_37, %c0_38], %92 {strides = array<i32>} : memref<1x128xf32, #tpu.memory_space<vmem>>, vector<1x128xf32>,
    } else {
    }
    return
  }
  func.func @transform_0(%arg0: i32, %arg1: i32) -> (i32, i32) {
    %c0_i32 = arith.constant 0 : i32
    return %arg1, %arg0 : i32, i32
  }
  func.func @transform_1(%arg0: i32, %arg1: i32) -> (i32, i32) {
    %c0_i32 = arith.constant 0 : i32
    %c0_i32_0 = arith.constant 0 : i32
    return %c0_i32, %arg0 : i32, i32
  }
  func.func @transform_2(%arg0: i32, %arg1: i32) -> (i32, i32) {
    %c0_i32 = arith.constant 0 : i32
    %c0_i32_0 = arith.constant 0 : i32
    return %c0_i32, %arg0 : i32, i32
  }
  func.func @transform_3(%arg0: i32, %arg1: i32) -> (i32, i32) {
    %c0_i32 = arith.constant 0 : i32
    %c0_i32_0 = arith.constant 0 : i32
    %c0_i32_1 = arith.constant 0 : i32
    return %c0_i32, %c0_i32_0 : i32, i32
  }
  func.func @transform_4(%arg0: i32, %arg1: i32) -> (i32, i32) {
    %c0_i32 = arith.constant 0 : i32
    %c0_i32_0 = arith.constant 0 : i32
    %c0_i32_1 = arith.constant 0 : i32
    return %c0_i32, %c0_i32_0 : i32, i32
  }
  func.func @transform_5(%arg0: i32, %arg1: i32) -> (i32, i32, i32) {
    %c0_i32 = arith.constant 0 : i32
    %c0_i32_0 = arith.constant 0 : i32
    return %c0_i32, %arg1, %arg0 : i32, i32, i32
  }
  func.func @transform_6(%arg0: i32, %arg1: i32) -> (i32, i32) {
    %c0_i32 = arith.constant 0 : i32
    %c0_i32_0 = arith.constant 0 : i32
    return %c0_i32, %arg0 : i32, i32
  }
  func.func @transform_7(%arg0: i32, %arg1: i32) -> (i32, i32) {
    %c0_i32 = arith.constant 0 : i32
    %c0_i32_0 = arith.constant 0 : i32
    return %c0_i32, %arg0 : i32, i32
  }
}

module attributes {stable_mosaic.version = 11 : i64} {
  func.func @_encode_kernel(%arg0: i32, %arg1: i32, %arg2: memref<4x384xbf16, #tpu.memory_space<vmem>>, %arg3: memref<384x128xbf16, #tpu.memory_space<vmem>>, %arg4: memref<1x4x128xf32, #tpu.memory_space<vmem>>) attributes {dimension_semantics = [#tpu.dimension_semantics<parallel>, #tpu.dimension_semantics<arbitrary>], iteration_bounds = array<i64: 2, 1>, scalar_prefetch = 0 : i64, scratch_operands = 0 : i64, tpu.core_type = #tpu.core_type<tc>, window_params = [{transform_indices = @transform_0, window_bounds = array<i64: 4, 384>}, {transform_indices = @transform_1, window_bounds = array<i64: 384, 128>}, {transform_indices = @transform_2, window_bounds = array<i64: 1, 4, 128>}]} {
    %c0_i32 = arith.constant 0 : i32
    %0 = arith.cmpi eq, %arg1, %c0_i32 : i32
    %1 = arith.extui %0 : i1 to i32
    %c0_i32_0 = arith.constant 0 : i32
    %2 = arith.cmpi ne, %1, %c0_i32_0 : i32
    scf.if %2 {
      %cst_10 = arith.constant 0.000000e+00 : f32
      %10 = vector.broadcast %cst_10 : f32 to vector<1x4x128xf32>
      %c0_11 = arith.constant 0 : index
      %c0_12 = arith.constant 0 : index
      %c0_13 = arith.constant 0 : index
      %11 = vector.load %arg4[%c0_11, %c0_12, %c0_13] : memref<1x4x128xf32, #tpu.memory_space<vmem>>, vector<1x4x128xf32>
      tpu.vector_store %arg4[%c0_11, %c0_12, %c0_13], %10 {strides = array<i32>} : memref<1x4x128xf32, #tpu.memory_space<vmem>>, vector<1x4x128xf32>,
    } else {
    }
    %c0 = arith.constant 0 : index
    %c0_1 = arith.constant 0 : index
    %3 = vector.load %arg2[%c0, %c0_1] : memref<4x384xbf16, #tpu.memory_space<vmem>>, vector<4x384xbf16>
    %c0_2 = arith.constant 0 : index
    %c0_3 = arith.constant 0 : index
    %4 = vector.load %arg3[%c0_2, %c0_3] : memref<384x128xbf16, #tpu.memory_space<vmem>>, vector<384x128xbf16>
    %cst = arith.constant dense<0.000000e+00> : vector<4x128xf32>
    %5 = tpu.matmul %3, %4, %cst {dimension_numbers = #tpu.dot_dimension_numbers<[1], [0], [0], [1], [0, 0, 1, 1], [], []>} : vector<4x384xbf16>, vector<384x128xbf16>, vector<4x128xf32> -> vector<4x128xf32>
    %c0_4 = arith.constant 0 : index
    %c0_5 = arith.constant 0 : index
    %c0_6 = arith.constant 0 : index
    %6 = vector.load %arg4[%c0_4, %c0_5, %c0_6] : memref<1x4x128xf32, #tpu.memory_space<vmem>>, vector<1x4x128xf32>
    %7 = vector.shape_cast %5 : vector<4x128xf32> to vector<1x4x128xf32>
    %8 = arith.addf %6, %7 : vector<1x4x128xf32>
    %c0_7 = arith.constant 0 : index
    %c0_8 = arith.constant 0 : index
    %c0_9 = arith.constant 0 : index
    %9 = vector.load %arg4[%c0_7, %c0_8, %c0_9] : memref<1x4x128xf32, #tpu.memory_space<vmem>>, vector<1x4x128xf32>
    tpu.vector_store %arg4[%c0_7, %c0_8, %c0_9], %8 {strides = array<i32>} : memref<1x4x128xf32, #tpu.memory_space<vmem>>, vector<1x4x128xf32>,
    return
  }
  func.func @transform_0(%arg0: i32, %arg1: i32) -> (i32, i32) {
    %c1_i32 = arith.constant 1 : i32
    %0 = arith.muli %arg0, %c1_i32 : i32
    %1 = arith.addi %0, %arg1 : i32
    %c0_i32 = arith.constant 0 : i32
    %c0_i32_0 = arith.constant 0 : i32
    return %c0_i32, %1 : i32, i32
  }
  func.func @transform_1(%arg0: i32, %arg1: i32) -> (i32, i32) {
    %c1_i32 = arith.constant 1 : i32
    %0 = arith.muli %arg0, %c1_i32 : i32
    %1 = arith.addi %0, %arg1 : i32
    %c0_i32 = arith.constant 0 : i32
    %c0_i32_0 = arith.constant 0 : i32
    return %1, %c0_i32 : i32, i32
  }
  func.func @transform_2(%arg0: i32, %arg1: i32) -> (i32, i32, i32) {
    %c0_i32 = arith.constant 0 : i32
    %c0_i32_0 = arith.constant 0 : i32
    %c0_i32_1 = arith.constant 0 : i32
    return %arg0, %c0_i32, %c0_i32_0 : i32, i32, i32
  }
}

</mosaic_0001>

<llo_original>
// kernel: patch_attack_forward.2
$region0: #{patch_attack_forward.2}
  #allocation0 [shape = 'u32[]', space=smem, size = 0x4, offset = 0x4, fixed_abs, tag = 'smem constant byte address 0x4 - core index']
  #allocation1 [shape = 'u32[144,128]{1,0:T(1,128)}', space=vmem, size = 0x12000, scoped, tag = 'internal scratch']
  %s0 = inlined_call_operand.vmem [shape: f32[2,768], index: 0, kind: input, shape index: {}]
  %s1 = inlined_call_operand.vmem [shape: f32[1,768], index: 1, kind: input, shape index: {}]
  %s2 = inlined_call_operand.vmem [shape: f32[1,768], index: 2, kind: input, shape index: {}]
  %s3 = inlined_call_operand.vmem [shape: f32[1,256], index: 3, kind: input, shape index: {}]
  %s4 = inlined_call_operand.vmem [shape: f32[1,256], index: 4, kind: input, shape index: {}]
  %s5 = inlined_call_operand.vmem [shape: bf16[2,2,768], index: 5, kind: output, shape index: {0}]
  %s6 = inlined_call_operand.vmem [shape: f32[1,384], index: 6, kind: output, shape index: {1}]
  %s7 = inlined_call_operand.vmem [shape: f32[1,384], index: 7, kind: output, shape index: {2}]
  %8 = xla_tuple %s5, %s6, %s7
  %s9 = sld [smem:[#allocation0]]
  $region103: #{patch_attack_forward.2} parent=0
    _
  %s11 = ssub.s32 1, %s9
  %s12 = scalar_select 0, %s11, %s9
  $region1: #{patch_attack_forward.2} parent=0
    #allocation2 [shape = 'u8[4096]{0}', space=vmem, size = 0x1000, scoped, tag = 'output window, operand 0']
    loop: start=0, step=1, limit=5
    $region2: #{patch_attack_forward.2} parent=1 // loop_pre_header
      _
    $region3: #{patch_attack_forward.2} parent=1 // loop_header
      %s14 = sphi 0, %s18
      %p15 = scmp.ge.s32.totalorder %s14, 5
      %s21 = sphi 0, %s33
      %s22 = sphi 0, %s29
      %s23 = sphi 0, %s21
      %s24 = sphi 0, %s22
      %s25 = sphi 0, %s23
      %s26 = sphi 0, %s24
      %s38 = sphi 0, %s40
      %s41 = sphi 0, %s38
      %s42 = sphi 0, %s41
      %s58 = sphi 0, %s42
      %s64 = sphi 0, %s66
      %s67 = sphi 0, %s64
      %s68 = sphi 0, %s67
      %s84 = sphi 0, %s68
      %s90 = sphi 0, %s92
      %s93 = sphi 0, %s90
      %s94 = sphi 0, %s93
      %s110 = sphi 0, %s94
      %s114 = sphi 0, %s114
      %s116 = sphi 0, %s114
      %s117 = sphi 0, %s116
      %s131 = sphi 0, %s117
      %s135 = sphi 0, %s135
      %s137 = sphi 0, %s135
      %s138 = sphi 0, %s137
      %s152 = sphi 0, %s138
      %s160 = sphi 0, %s162
      %s163 = sphi 0, %s160
      %s164 = sphi 0, %s163
      %s180 = sphi 0, %s164
      %s186 = sphi 0, %s188
      %s189 = sphi 0, %s186
      %s190 = sphi 0, %s189
      %s206 = sphi 0, %s190
      %s212 = sphi 0, %s214
      %s215 = sphi 0, %s212
      %s216 = sphi 0, %s215
      %s232 = sphi 0, %s216
    $region4: #{patch_attack_forward.2} parent=1 // loop_header_branch
      %17 = sbr.rel (%p15) target = $region8
    $region5: #{patch_attack_forward.2} parent=1 // loop_body
      %s19 = ssub.s32 %s14, 1
      %s20 = ssub.s32 %s14, 2
      %s27 = sadd.s32 1, %s22
      %p28 = scmp.ge.s32.totalorder %s27, 1
      %s29 = scalar_select %p28, 0, %s27
      %s30 = sadd.s32 1, %s21
      %s31 = scalar_select %p28, %s30, %s21
      %p32 = scmp.ge.s32.totalorder %s31, 3
      %s33 = scalar_select %p32, 0, %s31
      %s34 = ssub.s32 %s22, %s29
      %s35 = ssub.s32 %s21, %s33
      %s36 = sor.u32 %s34, %s35
      %p37 = scmp.eq.s32.totalorder %s36, 0
      %s39 = sadd.s32 %s38, 1
      %s40 = scalar_select %p37, %s38, %s39
      %p43 = pneg %p37
      %p44 = scmp.eq.s32.totalorder %s14, 2
      %p45 = por %p43, %p44
      %p46 = scmp.ne.s32.totalorder %s38, %s41
      %p47 = scmp.eq.s32.totalorder %s14, 0
      %p48 = por %p46, %p47
      %p49 = scmp.ne.s32.totalorder %s38, %s41
      %p50 = scmp.eq.s32.totalorder %s19, 2
      %p51 = por %p49, %p50
      %p52 = scmp.ne.s32.totalorder %s41, %s42
      %p53 = scmp.eq.s32.totalorder %s19, 0
      %p54 = por %p52, %p53
      %p55 = scmp.ne.s32.totalorder %s41, %s42
      %p56 = scmp.eq.s32.totalorder %s20, 2
      %p57 = por %p55, %p56
      %p59 = scmp.ne.s32.totalorder %s42, %s58
      %p60 = scmp.eq.s32.totalorder %s20, 0
      %p61 = por %p59, %p60
      %s62 = ssub.s32 %s21, %s33
      %p63 = scmp.eq.s32.totalorder %s62, 0
      %s65 = sadd.s32 %s64, 1
      %s66 = scalar_select %p63, %s64, %s65
      %p69 = pneg %p63
      %p70 = scmp.eq.s32.totalorder %s14, 2
      %p71 = por %p69, %p70
      %p72 = scmp.ne.s32.totalorder %s64, %s67
      %p73 = scmp.eq.s32.totalorder %s14, 0
      %p74 = por %p72, %p73
      %p75 = scmp.ne.s32.totalorder %s64, %s67
      %p76 = scmp.eq.s32.totalorder %s19, 2
      %p77 = por %p75, %p76
      %p78 = scmp.ne.s32.totalorder %s67, %s68
      %p79 = scmp.eq.s32.totalorder %s19, 0
      %p80 = por %p78, %p79
      %p81 = scmp.ne.s32.totalorder %s67, %s68
      %p82 = scmp.eq.s32.totalorder %s20, 2
      %p83 = por %p81, %p82
      %p85 = scmp.ne.s32.totalorder %s68, %s84
      %p86 = scmp.eq.s32.totalorder %s20, 0
      %p87 = por %p85, %p86
      %s88 = ssub.s32 %s21, %s33
      %p89 = scmp.eq.s32.totalorder %s88, 0
      %s91 = sadd.s32 %s90, 1
      %s92 = scalar_select %p89, %s90, %s91
      %p95 = pneg %p89
      %p96 = scmp.eq.s32.totalorder %s14, 2
      %p97 = por %p95, %p96
      %p98 = scmp.ne.s32.totalorder %s90, %s93
      %p99 = scmp.eq.s32.totalorder %s14, 0
      %p100 = por %p98, %p99
      %p101 = scmp.ne.s32.totalorder %s90, %s93
      %p102 = scmp.eq.s32.totalorder %s19, 2
      %p103 = por %p101, %p102
      %p104 = scmp.ne.s32.totalorder %s93, %s94
      %p105 = scmp.eq.s32.totalorder %s19, 0
      %p106 = por %p104, %p105
      %p107 = scmp.ne.s32.totalorder %s93, %s94
      %p108 = scmp.eq.s32.totalorder %s20, 2
      %p109 = por %p107, %p108
      %p111 = scmp.ne.s32.totalorder %s94, %s110
      %p112 = scmp.eq.s32.totalorder %s20, 0
      %p113 = por %p111, %p112
      %s115 = sadd.s32 %s114, 1
      %p118 = scmp.eq.s32.totalorder %s14, 2
      %p119 = scmp.ne.s32.totalorder %s114, %s116
      %p120 = scmp.eq.s32.totalorder %s14, 0
      %p121 = por %p119, %p120
      %p122 = scmp.ne.s32.totalorder %s114, %s116
      %p123 = scmp.eq.s32.totalorder %s19, 2
      %p124 = por %p122, %p123
      %p125 = scmp.ne.s32.totalorder %s116, %s117
      %p126 = scmp.eq.s32.totalorder %s19, 0
      %p127 = por %p125, %p126
      %p128 = scmp.ne.s32.totalorder %s116, %s117
      %p129 = scmp.eq.s32.totalorder %s20, 2
      %p130 = por %p128, %p129
      %p132 = scmp.ne.s32.totalorder %s117, %s131
      %p133 = scmp.eq.s32.totalorder %s20, 0
      %p134 = por %p132, %p133
      %s136 = sadd.s32 %s135, 1
      %p139 = scmp.eq.s32.totalorder %s14, 2
      %p140 = scmp.ne.s32.totalorder %s135, %s137
      %p141 = scmp.eq.s32.totalorder %s14, 0
      %p142 = por %p140, %p141
      %p143 = scmp.ne.s32.totalorder %s135, %s137
      %p144 = scmp.eq.s32.totalorder %s19, 2
      %p145 = por %p143, %p144
      %p146 = scmp.ne.s32.totalorder %s137, %s138
      %p147 = scmp.eq.s32.totalorder %s19, 0
      %p148 = por %p146, %p147
      %p149 = scmp.ne.s32.totalorder %s137, %s138
      %p150 = scmp.eq.s32.totalorder %s20, 2
      %p151 = por %p149, %p150
      %p153 = scmp.ne.s32.totalorder %s138, %s152
      %p154 = scmp.eq.s32.totalorder %s20, 0
      %p155 = por %p153, %p154
      %s156 = ssub.s32 %s22, %s29
      %s157 = ssub.s32 %s21, %s33
      %s158 = sor.u32 %s156, %s157
      %p159 = scmp.eq.s32.totalorder %s158, 0
      %s161 = sadd.s32 %s160, 1
      %s162 = scalar_select %p159, %s160, %s161
      %p165 = pneg %p159
      %p166 = scmp.eq.s32.totalorder %s14, 2
      %p167 = por %p165, %p166
      %p168 = scmp.ne.s32.totalorder %s160, %s163
      %p169 = scmp.eq.s32.totalorder %s14, 0
      %p170 = por %p168, %p169
      %p171 = scmp.ne.s32.totalorder %s160, %s163
      %p172 = scmp.eq.s32.totalorder %s19, 2
      %p173 = por %p171, %p172
      %p174 = scmp.ne.s32.totalorder %s163, %s164
      %p175 = scmp.eq.s32.totalorder %s19, 0
      %p176 = por %p174, %p175
      %p177 = scmp.ne.s32.totalorder %s163, %s164
      %p178 = scmp.eq.s32.totalorder %s20, 2
      %p179 = por %p177, %p178
      %p181 = scmp.ne.s32.totalorder %s164, %s180
      %p182 = scmp.eq.s32.totalorder %s20, 0
      %p183 = por %p181, %p182
      %s184 = ssub.s32 %s21, %s33
      %p185 = scmp.eq.s32.totalorder %s184, 0
      %s187 = sadd.s32 %s186, 1
      %s188 = scalar_select %p185, %s186, %s187
      %p191 = pneg %p185
      %p192 = scmp.eq.s32.totalorder %s14, 2
      %p193 = por %p191, %p192
      %p194 = scmp.ne.s32.totalorder %s186, %s189
      %p195 = scmp.eq.s32.totalorder %s14, 0
      %p196 = por %p194, %p195
      %p197 = scmp.ne.s32.totalorder %s186, %s189
      %p198 = scmp.eq.s32.totalorder %s19, 2
      %p199 = por %p197, %p198
      %p200 = scmp.ne.s32.totalorder %s189, %s190
      %p201 = scmp.eq.s32.totalorder %s19, 0
      %p202 = por %p200, %p201
      %p203 = scmp.ne.s32.totalorder %s189, %s190
      %p204 = scmp.eq.s32.totalorder %s20, 2
      %p205 = por %p203, %p204
      %p207 = scmp.ne.s32.totalorder %s190, %s206
      %p208 = scmp.eq.s32.totalorder %s20, 0
      %p209 = por %p207, %p208
      %s210 = ssub.s32 %s21, %s33
      %p211 = scmp.eq.s32.totalorder %s210, 0
      %s213 = sadd.s32 %s212, 1
      %s214 = scalar_select %p211, %s212, %s213
      %p217 = pneg %p211
      %p218 = scmp.eq.s32.totalorder %s14, 2
      %p219 = por %p217, %p218
      %p220 = scmp.ne.s32.totalorder %s212, %s215
      %p221 = scmp.eq.s32.totalorder %s14, 0
      %p222 = por %p220, %p221
      %p223 = scmp.ne.s32.totalorder %s212, %s215
      %p224 = scmp.eq.s32.totalorder %s19, 2
      %p225 = por %p223, %p224
      %p226 = scmp.ne.s32.totalorder %s215, %s216
      %p227 = scmp.eq.s32.totalorder %s19, 0
      %p228 = por %p226, %p227
      %p229 = scmp.ne.s32.totalorder %s215, %s216
      %p230 = scmp.eq.s32.totalorder %s20, 2
      %p231 = por %p229, %p230
      %p233 = scmp.ne.s32.totalorder %s216, %s232
      %p234 = scmp.eq.s32.totalorder %s20, 0
      %p235 = por %p233, %p234
      %p236 = scmp.le.s32.totalorder 1, %s14
      %p237 = scmp.lt.s32.totalorder %s14, 4
      %p238 = pnand %p236, %p237
      %p239 = pneg %p238
      // Predicated region
      $region9: #{patch_attack_forward.2} parent=5 // pred_check
        _
      $region10: #{patch_attack_forward.2} parent=5 // pred_check_branch
        %241 = sbr.rel (%p238) target = $region12
      $region11: #{patch_attack_forward.2} parent=5 // pred_region
        %s242 = ssub.s32 %s14, 1
        // Predicated region
        $region13: #{patch_attack_forward.2} parent=11 // pred_check
          %p243 = pneg %p127
        $region14: #{patch_attack_forward.2} parent=11 // pred_check_branch
          %245 = sbr.rel (%p243) target = $region16
        $region15: #{patch_attack_forward.2} parent=11 // pred_region
          _
        $region16: #{patch_attack_forward.2} parent=11 // pred_fallthru
          _
        // Predicated region
        $region17: #{patch_attack_forward.2} parent=11 // pred_check
          %p246 = pneg %p148
        $region18: #{patch_attack_forward.2} parent=11 // pred_check_branch
          %248 = sbr.rel (%p246) target = $region20
        $region19: #{patch_attack_forward.2} parent=11 // pred_region
          _
        $region20: #{patch_attack_forward.2} parent=11 // pred_fallthru
          _
      $region12: #{patch_attack_forward.2} parent=5 // pred_fallthru
        _
      %p249 = scmp.lt.s32.totalorder %s14, 3
      // Predicated region
      $region21: #{patch_attack_forward.2} parent=5 // pred_check
        %p250 = pneg %p249
      $region22: #{patch_attack_forward.2} parent=5 // pred_check_branch
        %252 = sbr.rel (%p250) target = $region24
      $region23: #{patch_attack_forward.2} parent=5 // pred_region
        // Predicated region
        $region25: #{patch_attack_forward.2} parent=23 // pred_check
          %p253 = pneg %p48
        $region26: #{patch_attack_forward.2} parent=23 // pred_check_branch
          %255 = sbr.rel (%p253) target = $region28
        $region27: #{patch_attack_forward.2} parent=23 // pred_region
          %s256 = smul.u32 2, %s21
          %p257 = scmp.lt.s32.totalorder %s22, 0
          %s258 = scalar_select %p257, %s22, 0
          %p259 = scmp.lt.s32.totalorder %s256, 5
          %s260 = scalar_select %p259, %s256, 5
          %s261 = smul.addr %s258, 6
          %s262 = sadd.s32 %s260, %s261
          %s263 = smul.addr %s262, 2
          %s264 = scalar_lea.vmem %s0, %s263
          %s265 = smul.u32 2, %s21
        $region28: #{patch_attack_forward.2} parent=23 // pred_fallthru
          _
        // Predicated region
        $region29: #{patch_attack_forward.2} parent=23 // pred_check
          %p266 = pneg %p74
        $region30: #{patch_attack_forward.2} parent=23 // pred_check_branch
          %268 = sbr.rel (%p266) target = $region32
        $region31: #{patch_attack_forward.2} parent=23 // pred_region
          %s269 = smul.u32 2, %s21
          %p270 = scmp.lt.s32.totalorder %s269, 5
          %s271 = scalar_select %p270, %s269, 5
          %s272 = scalar_lea.vmem %s1, %s271
          %s273 = smul.u32 2, %s21
        $region32: #{patch_attack_forward.2} parent=23 // pred_fallthru
          _
        // Predicated region
        $region33: #{patch_attack_forward.2} parent=23 // pred_check
          %p274 = pneg %p100
        $region34: #{patch_attack_forward.2} parent=23 // pred_check_branch
          %276 = sbr.rel (%p274) target = $region36
        $region35: #{patch_attack_forward.2} parent=23 // pred_region
          %s277 = smul.u32 2, %s21
          %p278 = scmp.lt.s32.totalorder %s277, 5
          %s279 = scalar_select %p278, %s277, 5
          %s280 = scalar_lea.vmem %s2, %s279
          %s281 = smul.u32 2, %s21
        $region36: #{patch_attack_forward.2} parent=23 // pred_fallthru
          _
      $region24: #{patch_attack_forward.2} parent=5 // pred_fallthru
        _
      %p282 = scmp.le.s32.totalorder 1, %s14
      %p283 = scmp.lt.s32.totalorder %s14, 4
      %p284 = pnand %p282, %p283
      %p285 = pneg %p284
      // Predicated region
      $region37: #{patch_attack_forward.2} parent=5 // pred_check
        _
      $region38: #{patch_attack_forward.2} parent=5 // pred_check_branch
        %287 = sbr.rel (%p284) target = $region40
      $region39: #{patch_attack_forward.2} parent=5 // pred_region
        %s288 = ssub.s32 %s14, 1
        %s289 = smul.u32 2, %s23
        %p290 = scmp.lt.s32.totalorder %s24, 0
        %s291 = scalar_select %p290, %s24, 0
        %p292 = scmp.lt.s32.totalorder %s289, 5
        %s293 = scalar_select %p292, %s289, 5
        %s294 = smul.addr %s291, 6
        %s295 = sadd.s32 %s293, %s294
        %s296 = smul.addr %s295, 2
        %s297 = scalar_lea.vmem %s0, %s296
        %p298 = pneg %p54
        %p299 = pneg %p51
        %s300 = smul.u32 2, %s23
        %p301 = scmp.lt.s32.totalorder %s300, 5
        %s302 = scalar_select %p301, %s300, 5
        %s303 = scalar_lea.vmem %s1, %s302
        %p304 = pneg %p80
        %p305 = pneg %p77
        %s306 = smul.u32 2, %s23
        %p307 = scmp.lt.s32.totalorder %s306, 5
        %s308 = scalar_select %p307, %s306, 5
        %s309 = scalar_lea.vmem %s2, %s308
        %p310 = pneg %p106
        %p311 = pneg %p103
        %p312 = pneg %p127
        %p313 = pneg %p124
        %p314 = pneg %p148
        %p315 = pneg %p145
        %p316 = pneg %p176
        %p317 = pneg %p173
        %s318 = sand.u32 %s163, 1
        %s319 = sand.u32 %s163, 1
        %s320 = smul.addr %s319, 4
        %s321 = scalar_lea.vmem [#allocation2], %s320
        %p322 = pneg %p202
        %p323 = pneg %p199
        %p324 = scmp.lt.s32.totalorder %s23, 2
        %s325 = scalar_select %p324, %s23, 2
        %s326 = scalar_lea.vmem %s6, %s325
        %p327 = pneg %p228
        %p328 = pneg %p225
        %p329 = scmp.lt.s32.totalorder %s23, 2
        %s330 = scalar_select %p329, %s23, 2
        %s331 = scalar_lea.vmem %s7, %s330
        %s332 = smul.u32 2, %s23
        %p333 = scmp.lt.s32.totalorder %s24, 0
        %s334 = scalar_select %p333, %s24, 0
        %p335 = scmp.lt.s32.totalorder %s332, 5
        %s336 = scalar_select %p335, %s332, 5
        %s337 = smul.addr %s334, 6
        %s338 = sadd.s32 %s336, %s337
        %s339 = smul.addr %s338, 2
        %s340 = scalar_lea.vmem %s0, %s339
        %s341 = smul.u32 2, %s23
        %s342 = smul.u32 2, %s23
        %p343 = scmp.lt.s32.totalorder %s342, 5
        %s344 = scalar_select %p343, %s342, 5
        %s345 = scalar_lea.vmem %s1, %s344
        %s346 = smul.u32 2, %s23
        %s347 = smul.u32 2, %s23
        %p348 = scmp.lt.s32.totalorder %s347, 5
        %s349 = scalar_select %p348, %s347, 5
        %s350 = scalar_lea.vmem %s2, %s349
        %s351 = smul.u32 2, %s23
        %s352 = smul.u32 2, %s23
        %p353 = scmp.lt.s32.totalorder %s23, 2
        %s354 = scalar_select %p353, %s23, 2
        %s355 = scalar_lea.vmem %s6, %s354
        %p356 = scmp.lt.s32.totalorder %s23, 2
        %s357 = scalar_select %p356, %s23, 2
        %s358 = scalar_lea.vmem %s7, %s357
        %v359 = vld [vmem:[%s345] sm:$0x3]
        %v360 = vtanh.pop %v359
        %v361 = vadd.f32 %v360, 1.0
        %v362 = vmul.f32 %v361, 0.5
        %v363 = vld [vmem:[%s350] sm:$0x3]
        %v364 = vtanh.pop %v363
        %v365 = vadd.f32 %v364, 1.0
        %v366 = vmul.f32 %v365, 0.5
        %v367 = vld [vmem:[%s340] sm:$0xf]
        %v368 = vmul.f32 %v366, %v362
        %v369 = vsub.f32 1.0, %v362
        %v371 = vlaneseq
        %v372 = vshrl.u32 %v371, 7
        %v373 = vsub.s32 0, %v372
        %v374 = vrot.slane %v369, %v373
        %v375 = vlaneseq
        %v376 = vshrl.u32 %v375, 7
        %v377 = vsub.s32 1, %v376
        %v378 = vrot.slane %v369, %v377
        %v383 = vunpack.c.l.s4 1983009808
        %v384 = vunpack.c.0.s8 %v383
        %v385 = vlaneseq
        %v386 = vshrl.u32 %v385, 7
        %v387 = vsub.s32 %v384, %v386
        %v388 = vrot.slane %v367, %v387
        %v389 = vcombine.high %v388, %v388
        %v392 = vmul.f32 %v374, %v388
        %v393 = vmul.f32 %v378, %v389
        %v395 = vlaneseq
        %v396 = vshrl.u32 %v395, 7
        %v397 = vsub.s32 0, %v396
        %v398 = vrot.slane %v368, %v397
        %v399 = vlaneseq
        %v400 = vshrl.u32 %v399, 7
        %v401 = vsub.s32 1, %v400
        %v402 = vrot.slane %v368, %v401
        %v405 = vadd.f32 %v398, %v392
        %v406 = vadd.f32 %v402, %v393
        %v407 = vmax.f32 %v405, 0.0
        %v408 = vmax.f32 %v406, 0.0
        %v409 = vmin.f32 %v407, 1.0
        %v410 = vmin.f32 %v408, 1.0
        %v411 = vpack.c.bf16 %v409, %v409
        %v412 = vpack.c.bf16 %v410, %v410
        %v415 = vcombine.low %v411, %v412
        %v417 = vunpack.c.l.s4 1966171168
        %v418 = vunpack.c.0.s8 %v417
        %v419 = vlaneseq
        %v420 = vshrl.u32 %v419, 7
        %v421 = vsub.s32 %v418, %v420
        %v422 = vrot.slane %v415, %v421
        %v424 = vunpack.c.l.s4 1966171168
        %v425 = vunpack.c.0.s8 %v424
        %v426 = vlaneseq
        %v427 = vshrl.u32 %v426, 7
        %v428 = vsub.s32 %v425, %v427
        %v429 = vrot.slane %v422, %v428
        %431 = vst [vmem:[%s321] sm:$0x3] %v429
        %v432 = vpack.c.bf16 %v388, %v388
        %v433 = vpack.c.bf16 %v389, %v389
        %v436 = vcombine.low %v432, %v433
        %v438 = vunpack.c.l.s4 1966171168
        %v439 = vunpack.c.0.s8 %v438
        %v440 = vlaneseq
        %v441 = vshrl.u32 %v440, 7
        %v442 = vsub.s32 %v439, %v441
        %v443 = vrot.slane %v436, %v442
        %v445 = vunpack.c.l.s4 1966171168
        %v446 = vunpack.c.0.s8 %v445
        %v447 = vlaneseq
        %v448 = vshrl.u32 %v447, 7
        %v449 = vsub.s32 %v446, %v448
        %v450 = vrot.slane %v443, %v449
        %s452 = scalar_lea.vmem %s321, 2 [#allocation2]
        %453 = vst [vmem:[%s452] sm:$0x3] %v450
        %p454 = scmp.eq.s32.totalorder %s24, 0
        // Predicated region
        $region41: #{patch_attack_forward.2} parent=39 // pred_check
          %p455 = pneg %p454
        $region42: #{patch_attack_forward.2} parent=39 // pred_check_branch
          %457 = sbr.rel (%p455) target = $region44
        $region43: #{patch_attack_forward.2} parent=39 // pred_region
          %v458 = vand.u32 2147483647, %v362
          %v460 = vlaneseq
          %v461 = vshrl.u32 %v460, 7
          %v462 = vsub.s32 0, %v461
          %v463 = vrot.slane %v458, %v462
          %v464 = vlaneseq
          %v465 = vshrl.u32 %v464, 7
          %v466 = vsub.s32 1, %v465
          %v467 = vrot.slane %v458, %v466
          %vm470 = vcmask 1040384
          %v471 = vsel %vm470, %v463, 0.0
          %v472 = vsel %vm470, %v467, 0.0
          %v473 = vadd.f32 %v471, %v472
          %474 = vadd.xlane.f32.xlu0 %v473
          %v475 = vpop.xlane.xlu0 %474
          %v476 = vrot.slane %v475, 4
          %v477 = vadd.f32 %v475, %v476
          %v478 = vrot.slane %v477, 2
          %v479 = vadd.f32 %v477, %v478
          %v480 = vrot.slane %v479, 1
          %v481 = vadd.f32 %v479, %v480
          %s482 = vtos %v481
          %v484 = vlaneseq
          %v485 = vshrl.u32 %v484, 7
          %v486 = vsub.s32 0, %v485
          %v487 = vrot.slane %v362, %v486
          %v488 = vlaneseq
          %v489 = vshrl.u32 %v488, 7
          %v490 = vsub.s32 1, %v489
          %v491 = vrot.slane %v362, %v490
          %494 = vrot.lane.b32.xlu0 %v487, 127
          %v495 = vpop.permute.xlu0 %494
          %496 = vrot.lane.b32.xlu0 %v491, 127
          %v497 = vpop.permute.xlu0 %496
          %v498 = vlaneseq
          %v499 = vand.u32 %v498, 127
          %vm500 = vcmp.lt.s32.totalorder %v499, 127
          %v501 = vsel %vm500, %v495, %v497
          %v502 = vsel %vm500, %v497, %v495
          %v503 = vsub.f32 %v501, %v487
          %v504 = vsub.f32 %v502, %v491
          %505 = vrot.lane.b32.xlu0 %v487, 112
          %v506 = vpop.permute.xlu0 %505
          %507 = vrot.lane.b32.xlu0 %v491, 112
          %v508 = vpop.permute.xlu0 %507
          %vm509 = vcmp.lt.s32.totalorder %v499, 112
          %v510 = vsel %vm509, %v506, %v508
          %v511 = vsel %vm509, %v508, %v506
          %v512 = vsub.f32 %v510, %v487
          %v513 = vsub.f32 %v511, %v491
          %v514 = vmul.f32 %v503, %v503
          %v515 = vmul.f32 %v504, %v504
          %v516 = vld [vmem:[%s3] sm:$0x3]
          %v518 = vlaneseq
          %v519 = vshrl.u32 %v518, 7
          %v520 = vsub.s32 0, %v519
          %v521 = vrot.slane %v516, %v520
          %v522 = vlaneseq
          %v523 = vshrl.u32 %v522, 7
          %v524 = vsub.s32 1, %v523
          %v525 = vrot.slane %v516, %v524
          %v528 = vmul.f32 %v514, %v521
          %v529 = vmul.f32 %v515, %v525
          %v530 = vsel %vm470, %v528, 0.0
          %v531 = vsel %vm470, %v529, 0.0
          %v532 = vadd.f32 %v530, %v531
          %533 = vadd.xlane.f32.xlu0 %v532
          %v534 = vpop.xlane.xlu0 %533
          %v535 = vrot.slane %v534, 4
          %v536 = vadd.f32 %v534, %v535
          %v537 = vrot.slane %v536, 2
          %v538 = vadd.f32 %v536, %v537
          %v539 = vrot.slane %v538, 1
          %v540 = vadd.f32 %v538, %v539
          %s541 = vtos %v540
          %v542 = vstv %s541
          %v543 = vmul.f32 %v512, %v512
          %v544 = vmul.f32 %v513, %v513
          %v545 = vld [vmem:[%s4] sm:$0x3]
          %v547 = vlaneseq
          %v548 = vshrl.u32 %v547, 7
          %v549 = vsub.s32 0, %v548
          %v550 = vrot.slane %v545, %v549
          %v551 = vlaneseq
          %v552 = vshrl.u32 %v551, 7
          %v553 = vsub.s32 1, %v552
          %v554 = vrot.slane %v545, %v553
          %v557 = vmul.f32 %v543, %v550
          %v558 = vmul.f32 %v544, %v554
          %v559 = vsel %vm470, %v557, 0.0
          %v560 = vsel %vm470, %v558, 0.0
          %v561 = vadd.f32 %v559, %v560
          %562 = vadd.xlane.f32.xlu0 %v561
          %v563 = vpop.xlane.xlu0 %562
          %v564 = vrot.slane %v563, 4
          %v565 = vadd.f32 %v563, %v564
          %v566 = vrot.slane %v565, 2
          %v567 = vadd.f32 %v565, %v566
          %v568 = vrot.slane %v567, 1
          %v569 = vadd.f32 %v567, %v568
          %s570 = vtos %v569
          %v571 = vstv %s570
          %v572 = vadd.f32 %v542, %v571
          %v574 = vlaneseq
          %v575 = vshrl.u32 %v574, 7
          %v576 = vsub.s32 0, %v575
          %v577 = vrot.slane %v366, %v576
          %v578 = vlaneseq
          %v579 = vshrl.u32 %v578, 7
          %v580 = vsub.s32 1, %v579
          %v581 = vrot.slane %v366, %v580
          %584 = vrot.lane.b32.xlu0 %v577, 127
          %v585 = vpop.permute.xlu0 %584
          %586 = vrot.lane.b32.xlu0 %v581, 127
          %v587 = vpop.permute.xlu0 %586
          %v588 = vsel %vm500, %v585, %v587
          %v589 = vsel %vm500, %v587, %v585
          %v590 = vsub.f32 %v588, %v577
          %v591 = vsub.f32 %v589, %v581
          %592 = vrot.lane.b32.xlu0 %v577, 112
          %v593 = vpop.permute.xlu0 %592
          %594 = vrot.lane.b32.xlu0 %v581, 112
          %v595 = vpop.permute.xlu0 %594
          %v596 = vsel %vm509, %v593, %v595
          %v597 = vsel %vm509, %v595, %v593
          %v598 = vsub.f32 %v596, %v577
          %v599 = vsub.f32 %v597, %v581
          %v600 = vmul.f32 %v590, %v590
          %v601 = vmul.f32 %v591, %v591
          %v602 = vmul.f32 %v600, %v521
          %v603 = vmul.f32 %v601, %v525
          %v604 = vsel %vm470, %v602, 0.0
          %v605 = vsel %vm470, %v603, 0.0
          %v606 = vadd.f32 %v604, %v605
          %607 = vadd.xlane.f32.xlu0 %v606
          %v608 = vpop.xlane.xlu0 %607
          %v609 = vrot.slane %v608, 4
          %v610 = vadd.f32 %v608, %v609
          %v611 = vrot.slane %v610, 2
          %v612 = vadd.f32 %v610, %v611
          %v613 = vrot.slane %v612, 1
          %v614 = vadd.f32 %v612, %v613
          %s615 = vtos %v614
          %v616 = vstv %s615
          %v617 = vmul.f32 %v598, %v598
          %v618 = vmul.f32 %v599, %v599
          %v619 = vmul.f32 %v617, %v550
          %v620 = vmul.f32 %v618, %v554
          %v621 = vsel %vm470, %v619, 0.0
          %v622 = vsel %vm470, %v620, 0.0
          %v623 = vadd.f32 %v621, %v622
          %624 = vadd.xlane.f32.xlu0 %v623
          %v625 = vpop.xlane.xlu0 %624
          %v626 = vrot.slane %v625, 4
          %v627 = vadd.f32 %v625, %v626
          %v628 = vrot.slane %v627, 2
          %v629 = vadd.f32 %v627, %v628
          %v630 = vrot.slane %v629, 1
          %v631 = vadd.f32 %v629, %v630
          %s632 = vtos %v631
          %v633 = vstv %s632
          %v634 = vadd.f32 %v616, %v633
          %v635 = vadd.f32 %v572, %v634
          %v636 = vmul.f32 %v635, 0.0013020834
          %v637 = vstv %s482
          %v638 = vadd.f32 %v637, 0.0
          %639 = vst [vmem:[%s355] sm:$0x1] %v638
          %v640 = vadd.f32 %v636, 0.0
          %641 = vst [vmem:[%s358] sm:$0x1] %v640
        $region44: #{patch_attack_forward.2} parent=39 // pred_fallthru
          _
        %s642 = sand.u32 %s163, 1
        %s643 = sand.u32 %s163, 1
        %s644 = smul.addr %s643, 4
        %s645 = scalar_lea.vmem [#allocation2], %s644
        %p646 = scmp.lt.s32.totalorder %s23, 2
        %s647 = scalar_select %p646, %s23, 2
        %s648 = scalar_lea.vmem %s6, %s647
        %p649 = scmp.lt.s32.totalorder %s23, 2
        %s650 = scalar_select %p649, %s23, 2
        %s651 = scalar_lea.vmem %s7, %s650
        // Predicated region
        $region45: #{patch_attack_forward.2} parent=39 // pred_check
          %p652 = pneg %p173
        $region46: #{patch_attack_forward.2} parent=39 // pred_check_branch
          %654 = sbr.rel (%p652) target = $region48
        $region47: #{patch_attack_forward.2} parent=39 // pred_region
          %s655 = smul.u32 2, %s23
          %s656 = smul.addr %s24, 6
          %s657 = sadd.s32 %s655, %s656
          %s658 = scalar_lea.vmem %s5, %s657
          // Predicated region
          $region49: #{patch_attack_forward.2} parent=47 // pred_check
            _
          $region50: #{patch_attack_forward.2} parent=47 // pred_check_branch
            %660 = sbr.rel (0) target = $region52
          $region51: #{patch_attack_forward.2} parent=47 // pred_region
            // Predicated region
            $region53: #{patch_attack_forward.2} parent=51 // pred_check
              _
            $region54: #{patch_attack_forward.2} parent=51 // pred_check_branch
              %662 = sbr.rel target = $region56
            $region55: #{patch_attack_forward.2} parent=51 // pred_region
              // Predicated region
              $region68: #{patch_attack_forward.2} parent=55 // pred_check
                _
              $region69: #{patch_attack_forward.2} parent=55 // pred_check_branch
                %679 = sbr.rel (0) target = $region71
              $region70: #{patch_attack_forward.2} parent=55 // pred_region
                loop: start=0, step=1, limit=1
                $region72: #{patch_attack_forward.2} parent=70 // loop_pre_header
                  _
                $region73: #{patch_attack_forward.2} parent=70 // loop_header
                  %s682 = sphi 0, %s686
                  %p683 = scmp.ge.s32.totalorder %s682, 1
                  %s687 = sphi %s645, %s645
                  %s688 = sphi %s658, %s658
                $region74: #{patch_attack_forward.2} parent=70 // loop_header_branch
                  %685 = sbr.rel (%p683) target = $region78
                $region75: #{patch_attack_forward.2} parent=70 // loop_body
                  %v689 = vld [vmem:[%s687] sm:$0x3]
                  %690 = vst [vmem:[%s688] sm:$0x3] %v689
                  %v691 = vld [vmem:[%s687 + $0x2] sm:$0x3]
                  %692 = vst [vmem:[%s688 + $0x6] sm:$0x3] %v691
                $region76: #{patch_attack_forward.2} parent=70 // loop_footer
                  %s686 = sadd.s32 1, %s682
                $region77: #{patch_attack_forward.2} parent=70 // loop_footer_branch
                  %681 = sbr.rel target = $region73
                $region78: #{patch_attack_forward.2} parent=70 // loop_exit
                  _
              $region71: #{patch_attack_forward.2} parent=55 // pred_fallthru
                _
            $region56: #{patch_attack_forward.2} parent=51 // pred_fallthru
              _
            // Predicated region
            $region57: #{patch_attack_forward.2} parent=51 // pred_check
              _
            $region58: #{patch_attack_forward.2} parent=51 // pred_check_branch
              %664 = sbr.rel (0) target = $region60
            $region59: #{patch_attack_forward.2} parent=51 // pred_region
              loop: start=0, step=1, limit=1
              $region61: #{patch_attack_forward.2} parent=59 // loop_pre_header
                _
              $region62: #{patch_attack_forward.2} parent=59 // loop_header
                %s667 = sphi 0, %s671
                %p668 = scmp.ge.s32.totalorder %s667, 1
                %s672 = sphi %s645, %s645
                %s673 = sphi %s658, %s658
              $region63: #{patch_attack_forward.2} parent=59 // loop_header_branch
                %670 = sbr.rel (%p668) target = $region67
              $region64: #{patch_attack_forward.2} parent=59 // loop_body
                %v674 = vld [vmem:[%s672] sm:$0x3]
                %675 = vst [vmem:[%s673] sm:$0x3] %v674
                %v676 = vld [vmem:[%s672 + $0x2] sm:$0x3]
                %677 = vst [vmem:[%s673 + $0x6] sm:$0x3] %v676
              $region65: #{patch_attack_forward.2} parent=59 // loop_footer
                %s671 = sadd.s32 1, %s667
              $region66: #{patch_attack_forward.2} parent=59 // loop_footer_branch
                %666 = sbr.rel target = $region62
              $region67: #{patch_attack_forward.2} parent=59 // loop_exit
                _
            $region60: #{patch_attack_forward.2} parent=51 // pred_fallthru
              _
          $region52: #{patch_attack_forward.2} parent=47 // pred_fallthru
            _
          %693 = vnop
        $region48: #{patch_attack_forward.2} parent=39 // pred_fallthru
          _
        // Predicated region
        $region79: #{patch_attack_forward.2} parent=39 // pred_check
          %p694 = pneg %p199
        $region80: #{patch_attack_forward.2} parent=39 // pred_check_branch
          %696 = sbr.rel (%p694) target = $region82
        $region81: #{patch_attack_forward.2} parent=39 // pred_region
          _
        $region82: #{patch_attack_forward.2} parent=39 // pred_fallthru
          _
        // Predicated region
        $region83: #{patch_attack_forward.2} parent=39 // pred_check
          %p697 = pneg %p225
        $region84: #{patch_attack_forward.2} parent=39 // pred_check_branch
          %699 = sbr.rel (%p697) target = $region86
        $region85: #{patch_attack_forward.2} parent=39 // pred_region
          _
        $region86: #{patch_attack_forward.2} parent=39 // pred_fallthru
          _
      $region40: #{patch_attack_forward.2} parent=5 // pred_fallthru
        _
      %p700 = scmp.le.s32.totalorder 2, %s14
      // Predicated region
      $region87: #{patch_attack_forward.2} parent=5 // pred_check
        %p701 = pneg %p700
      $region88: #{patch_attack_forward.2} parent=5 // pred_check_branch
        %703 = sbr.rel (%p701) target = $region90
      $region89: #{patch_attack_forward.2} parent=5 // pred_region
        %s704 = ssub.s32 %s14, 2
        // Predicated region
        $region91: #{patch_attack_forward.2} parent=89 // pred_check
          %p705 = pneg %p179
        $region92: #{patch_attack_forward.2} parent=89 // pred_check_branch
          %707 = sbr.rel (%p705) target = $region94
        $region93: #{patch_attack_forward.2} parent=89 // pred_region
          %s708 = sand.u32 %s164, 1
          %s709 = sand.u32 %s164, 1
          %s710 = smul.addr %s709, 4
          %s711 = scalar_lea.vmem [#allocation2], %s710
        $region94: #{patch_attack_forward.2} parent=89 // pred_fallthru
          _
        // Predicated region
        $region95: #{patch_attack_forward.2} parent=89 // pred_check
          %p712 = pneg %p205
        $region96: #{patch_attack_forward.2} parent=89 // pred_check_branch
          %714 = sbr.rel (%p712) target = $region98
        $region97: #{patch_attack_forward.2} parent=89 // pred_region
          %p715 = scmp.lt.s32.totalorder %s25, 2
          %s716 = scalar_select %p715, %s25, 2
          %s717 = scalar_lea.vmem %s6, %s716
        $region98: #{patch_attack_forward.2} parent=89 // pred_fallthru
          _
        // Predicated region
        $region99: #{patch_attack_forward.2} parent=89 // pred_check
          %p718 = pneg %p231
        $region100: #{patch_attack_forward.2} parent=89 // pred_check_branch
          %720 = sbr.rel (%p718) target = $region102
        $region101: #{patch_attack_forward.2} parent=89 // pred_region
          %p721 = scmp.lt.s32.totalorder %s25, 2
          %s722 = scalar_select %p721, %s25, 2
          %s723 = scalar_lea.vmem %s7, %s722
        $region102: #{patch_attack_forward.2} parent=89 // pred_fallthru
          _
      $region90: #{patch_attack_forward.2} parent=5 // pred_fallthru
        _
    $region6: #{patch_attack_forward.2} parent=1 // loop_footer
      %s18 = sadd.s32 1, %s14
    $region7: #{patch_attack_forward.2} parent=1 // loop_footer_branch
      %13 = sbr.rel target = $region3
    $region8: #{patch_attack_forward.2} parent=1 // loop_exit
      _

// kernel: patch_attack_forward.3
$region0: #{patch_attack_forward.3}
  #allocation0 [shape = 'u32[]', space=smem, size = 0x4, offset = 0x4, fixed_abs, tag = 'smem constant byte address 0x4 - core index']
  #allocation1 [shape = 'u32[144,128]{1,0:T(1,128)}', space=vmem, size = 0x12000, scoped, tag = 'internal scratch']
  %s0 = inlined_call_operand.vmem [shape: bf16[4,768], index: 0, kind: input, shape index: {}]
  %s1 = inlined_call_operand.hbm [shape: bf16[768,128], index: 1, kind: input, shape index: {}]
  %s2 = inlined_call_operand.vmem [shape: f32[2,4,128], index: 2, kind: output, shape index: {}]
  %s3 = sld [smem:[#allocation0]]
  $region49: #{patch_attack_forward.3} parent=0
    _
  %s5 = ssub.s32 1, %s3
  %s6 = scalar_select 0, %s5, %s3
  $region1: #{patch_attack_forward.3} parent=0
    #allocation2 [shape = 'u8[196608]{0}', space=vmem, size = 0x30000, scoped, tag = 'input window, operand 1']
    #allocation3 [shape = 's32[2]{0}', space=sflag, size = 0x8, scoped, tag = 'scoped memory for patch_attack_forward.3']
    %7 = vsyncpa [#allocation3], 0
    %s8 = scalar_lea.sflag [#allocation3], 1
    %9 = vsyncpa %s8, 0
    loop: start=0, step=1, limit=4
    $region2: #{patch_attack_forward.3} parent=1 // loop_pre_header
      _
    $region3: #{patch_attack_forward.3} parent=1 // loop_header
      %s11 = sphi 0, %s15
      %p12 = scmp.ge.s32.totalorder %s11, 4
      %s18 = sphi 0, %s30
      %s19 = sphi 0, %s26
      %s20 = sphi 0, %s18
      %s21 = sphi 0, %s19
      %s22 = sphi 0, %s20
      %s23 = sphi 0, %s21
      %s35 = sphi 0, %s37
      %s38 = sphi 0, %s35
      %s39 = sphi 0, %s38
      %s55 = sphi 0, %s39
      %s63 = sphi 0, %s65
      %s66 = sphi 0, %s63
      %s67 = sphi 0, %s66
      %s83 = sphi 0, %s67
      %s89 = sphi 0, %s91
      %s92 = sphi 0, %s89
      %s93 = sphi 0, %s92
      %s109 = sphi 0, %s93
    $region4: #{patch_attack_forward.3} parent=1 // loop_header_branch
      %14 = sbr.rel (%p12) target = $region8
    $region5: #{patch_attack_forward.3} parent=1 // loop_body
      %s16 = ssub.s32 %s11, 1
      %s17 = ssub.s32 %s11, 2
      %s24 = sadd.s32 1, %s19
      %p25 = scmp.ge.s32.totalorder %s24, 1
      %s26 = scalar_select %p25, 0, %s24
      %s27 = sadd.s32 1, %s18
      %s28 = scalar_select %p25, %s27, %s18
      %p29 = scmp.ge.s32.totalorder %s28, 2
      %s30 = scalar_select %p29, 0, %s28
      %s31 = sadd.s32 %s18, %s19
      %s32 = sadd.s32 %s30, %s26
      %s33 = ssub.s32 %s31, %s32
      %p34 = scmp.eq.s32.totalorder %s33, 0
      %s36 = sadd.s32 %s35, 1
      %s37 = scalar_select %p34, %s35, %s36
      %p40 = pneg %p34
      %p41 = scmp.eq.s32.totalorder %s11, 1
      %p42 = por %p40, %p41
      %p43 = scmp.ne.s32.totalorder %s35, %s38
      %p44 = scmp.eq.s32.totalorder %s11, 0
      %p45 = por %p43, %p44
      %p46 = scmp.ne.s32.totalorder %s35, %s38
      %p47 = scmp.eq.s32.totalorder %s16, 1
      %p48 = por %p46, %p47
      %p49 = scmp.ne.s32.totalorder %s38, %s39
      %p50 = scmp.eq.s32.totalorder %s16, 0
      %p51 = por %p49, %p50
      %p52 = scmp.ne.s32.totalorder %s38, %s39
      %p53 = scmp.eq.s32.totalorder %s17, 1
      %p54 = por %p52, %p53
      %p56 = scmp.ne.s32.totalorder %s39, %s55
      %p57 = scmp.eq.s32.totalorder %s17, 0
      %p58 = por %p56, %p57
      %s59 = sadd.s32 %s18, %s19
      %s60 = sadd.s32 %s30, %s26
      %s61 = ssub.s32 %s59, %s60
      %p62 = scmp.eq.s32.totalorder %s61, 0
      %s64 = sadd.s32 %s63, 1
      %s65 = scalar_select %p62, %s63, %s64
      %p68 = pneg %p62
      %p69 = scmp.eq.s32.totalorder %s11, 1
      %p70 = por %p68, %p69
      %p71 = scmp.ne.s32.totalorder %s63, %s66
      %p72 = scmp.eq.s32.totalorder %s11, 0
      %p73 = por %p71, %p72
      %p74 = scmp.ne.s32.totalorder %s63, %s66
      %p75 = scmp.eq.s32.totalorder %s16, 1
      %p76 = por %p74, %p75
      %p77 = scmp.ne.s32.totalorder %s66, %s67
      %p78 = scmp.eq.s32.totalorder %s16, 0
      %p79 = por %p77, %p78
      %p80 = scmp.ne.s32.totalorder %s66, %s67
      %p81 = scmp.eq.s32.totalorder %s17, 1
      %p82 = por %p80, %p81
      %p84 = scmp.ne.s32.totalorder %s67, %s83
      %p85 = scmp.eq.s32.totalorder %s17, 0
      %p86 = por %p84, %p85
      %s87 = ssub.s32 %s18, %s30
      %p88 = scmp.eq.s32.totalorder %s87, 0
      %s90 = sadd.s32 %s89, 1
      %s91 = scalar_select %p88, %s89, %s90
      %p94 = pneg %p88
      %p95 = scmp.eq.s32.totalorder %s11, 1
      %p96 = por %p94, %p95
      %p97 = scmp.ne.s32.totalorder %s89, %s92
      %p98 = scmp.eq.s32.totalorder %s11, 0
      %p99 = por %p97, %p98
      %p100 = scmp.ne.s32.totalorder %s89, %s92
      %p101 = scmp.eq.s32.totalorder %s16, 1
      %p102 = por %p100, %p101
      %p103 = scmp.ne.s32.totalorder %s92, %s93
      %p104 = scmp.eq.s32.totalorder %s16, 0
      %p105 = por %p103, %p104
      %p106 = scmp.ne.s32.totalorder %s92, %s93
      %p107 = scmp.eq.s32.totalorder %s17, 1
      %p108 = por %p106, %p107
      %p110 = scmp.ne.s32.totalorder %s93, %s109
      %p111 = scmp.eq.s32.totalorder %s17, 0
      %p112 = por %p110, %p111
      %p113 = scmp.le.s32.totalorder 1, %s11
      %p114 = scmp.lt.s32.totalorder %s11, 3
      %p115 = pnand %p113, %p114
      %p116 = pneg %p115
      // Predicated region
      $region9: #{patch_attack_forward.3} parent=5 // pred_check
        _
      $region10: #{patch_attack_forward.3} parent=5 // pred_check_branch
        %118 = sbr.rel (%p115) target = $region12
      $region11: #{patch_attack_forward.3} parent=5 // pred_region
        %s119 = ssub.s32 %s11, 1
      $region12: #{patch_attack_forward.3} parent=5 // pred_fallthru
        _
      %p120 = scmp.lt.s32.totalorder %s11, 2
      // Predicated region
      $region13: #{patch_attack_forward.3} parent=5 // pred_check
        %p121 = pneg %p120
      $region14: #{patch_attack_forward.3} parent=5 // pred_check_branch
        %123 = sbr.rel (%p121) target = $region16
      $region15: #{patch_attack_forward.3} parent=5 // pred_region
        // Predicated region
        $region17: #{patch_attack_forward.3} parent=15 // pred_check
          %p124 = pneg %p45
        $region18: #{patch_attack_forward.3} parent=15 // pred_check_branch
          %126 = sbr.rel (%p124) target = $region20
        $region19: #{patch_attack_forward.3} parent=15 // pred_region
          %s127 = sadd.s32 %s18, %s19
          %s128 = smul.u32 3, %s127
          %p129 = scmp.lt.s32.totalorder %s128, 5
          %s130 = scalar_select %p129, %s128, 5
          %s131 = smul.addr %s130, 2
          %s132 = scalar_lea.vmem %s0, %s131
          %s133 = sadd.s32 %s18, %s19
          %s134 = smul.u32 3, %s133
        $region20: #{patch_attack_forward.3} parent=15 // pred_fallthru
          _
        // Predicated region
        $region21: #{patch_attack_forward.3} parent=15 // pred_check
          %p135 = pneg %p73
        $region22: #{patch_attack_forward.3} parent=15 // pred_check_branch
          %137 = sbr.rel (%p135) target = $region24
        $region23: #{patch_attack_forward.3} parent=15 // pred_region
          %s138 = sand.u32 %s63, 1
          %s139 = scalar_lea.sflag [#allocation3], %s138
          %s140 = sand.u32 %s63, 1
          %s141 = smul.addr %s140, 192
          %s142 = scalar_lea.vmem [#allocation2], %s141
          %s143 = sadd.s32 %s18, %s19
          %s144 = smul.u32 48, %s143
          %s146 = ssub.s32 3072, 3072
          %147 = vsyncadd %s139, %s146
          %s148 = smul.addr %s144, 64
          %s149 = scalar_lea.hbm %s1, %s148
          %s150 = sshll.u32 %s142, 4
          %s151 = int_to_ptr.vmem [resolvable:$true] %s150
          %156 = dma.hbm_to_vmem [thread:$0]  %s149, 3072, %s151, %s139, 64, 64, 4
        $region24: #{patch_attack_forward.3} parent=15 // pred_fallthru
          _
      $region16: #{patch_attack_forward.3} parent=5 // pred_fallthru
        _
      %p157 = scmp.le.s32.totalorder 1, %s11
      %p158 = scmp.lt.s32.totalorder %s11, 3
      %p159 = pnand %p157, %p158
      %p160 = pneg %p159
      // Predicated region
      $region25: #{patch_attack_forward.3} parent=5 // pred_check
        _
      $region26: #{patch_attack_forward.3} parent=5 // pred_check_branch
        %162 = sbr.rel (%p159) target = $region28
      $region27: #{patch_attack_forward.3} parent=5 // pred_region
        %s163 = ssub.s32 %s11, 1
        %s164 = sand.u32 %s66, 1
        %s165 = scalar_lea.sflag [#allocation3], %s164
        %s166 = sand.u32 %s66, 1
        %s167 = smul.addr %s166, 192
        %s168 = scalar_lea.vmem [#allocation2], %s167
        // Predicated region
        $region29: #{patch_attack_forward.3} parent=27 // pred_check
          %p169 = pneg %p79
        $region30: #{patch_attack_forward.3} parent=27 // pred_check_branch
          %171 = sbr.rel (%p169) target = $region32
        $region31: #{patch_attack_forward.3} parent=27 // pred_region
          %172 = dma.done %s165, 3072
        $region32: #{patch_attack_forward.3} parent=27 // pred_fallthru
          _
        %s173 = sadd.s32 %s20, %s21
        %s174 = smul.u32 3, %s173
        %p175 = scmp.lt.s32.totalorder %s174, 5
        %s176 = scalar_select %p175, %s174, 5
        %s177 = smul.addr %s176, 2
        %s178 = scalar_lea.vmem %s0, %s177
        %p179 = pneg %p51
        %p180 = pneg %p48
        %s181 = sand.u32 %s66, 1
        %s182 = scalar_lea.sflag [#allocation3], %s181
        %s183 = sand.u32 %s66, 1
        %s184 = smul.addr %s183, 192
        %s185 = scalar_lea.vmem [#allocation2], %s184
        %p186 = pneg %p79
        %p187 = pneg %p76
        %p188 = pneg %p105
        %p189 = pneg %p102
        %p190 = scmp.lt.s32.totalorder %s20, 1
        %s191 = scalar_select %p190, %s20, 1
        %s192 = smul.addr %s191, 4
        %s193 = scalar_lea.vmem %s2, %s192
        %s194 = sadd.s32 %s20, %s21
        %s195 = smul.u32 3, %s194
        %p196 = scmp.lt.s32.totalorder %s195, 5
        %s197 = scalar_select %p196, %s195, 5
        %s198 = smul.addr %s197, 2
        %s199 = scalar_lea.vmem %s0, %s198
        %s200 = sadd.s32 %s20, %s21
        %s201 = smul.u32 3, %s200
        %s202 = sadd.s32 %s20, %s21
        %s203 = smul.u32 48, %s202
        %p204 = scmp.lt.s32.totalorder %s20, 1
        %s205 = scalar_select %p204, %s20, 1
        %s206 = smul.addr %s205, 4
        %s207 = scalar_lea.vmem %s2, %s206
        %p209 = scmp.eq.s32.totalorder %s21, 0
        // Predicated region
        $region33: #{patch_attack_forward.3} parent=27 // pred_check
          %p210 = pneg %p209
        $region34: #{patch_attack_forward.3} parent=27 // pred_check_branch
          %212 = sbr.rel (%p210) target = $region36
        $region35: #{patch_attack_forward.3} parent=27 // pred_region
          %213 = vst [vmem:[%s207] sm:$0xf] 0.0
        $region36: #{patch_attack_forward.3} parent=27 // pred_fallthru
          _
        %v214 = vld [vmem:[%s199] sm:$0x3f]
        %v215 = vld [vmem:[%s168] sm:$0xf]
        %v216 = vld [vmem:[%s168 + $0x4] sm:$0xf]
        %v217 = vld [vmem:[%s168 + $0x8] sm:$0xf]
        %v218 = vld [vmem:[%s168 + $0xc] sm:$0xf]
        %v219 = vld [vmem:[%s168 + $0x10] sm:$0xf]
        %v220 = vld [vmem:[%s168 + $0x14] sm:$0xf]
        %v221 = vld [vmem:[%s168 + $0x18] sm:$0xf]
        %v222 = vld [vmem:[%s168 + $0x1c] sm:$0xf]
        %v223 = vld [vmem:[%s168 + $0x20] sm:$0xf]
        %v224 = vld [vmem:[%s168 + $0x24] sm:$0xf]
        %v225 = vld [vmem:[%s168 + $0x28] sm:$0xf]
        %v226 = vld [vmem:[%s168 + $0x2c] sm:$0xf]
        %v227 = vld [vmem:[%s168 + $0x30] sm:$0xf]
        %v228 = vld [vmem:[%s168 + $0x34] sm:$0xf]
        %v229 = vld [vmem:[%s168 + $0x38] sm:$0xf]
        %v230 = vld [vmem:[%s168 + $0x3c] sm:$0xf]
        %v231 = vld [vmem:[%s168 + $0x40] sm:$0xf]
        %v232 = vld [vmem:[%s168 + $0x44] sm:$0xf]
        %v233 = vld [vmem:[%s168 + $0x48] sm:$0xf]
        %v234 = vld [vmem:[%s168 + $0x4c] sm:$0xf]
        %v235 = vld [vmem:[%s168 + $0x50] sm:$0xf]
        %v236 = vld [vmem:[%s168 + $0x54] sm:$0xf]
        %v237 = vld [vmem:[%s168 + $0x58] sm:$0xf]
        %v238 = vld [vmem:[%s168 + $0x5c] sm:$0xf]
        %v239 = vld [vmem:[%s168 + $0x60] sm:$0xf]
        %v240 = vld [vmem:[%s168 + $0x64] sm:$0xf]
        %v241 = vld [vmem:[%s168 + $0x68] sm:$0xf]
        %v242 = vld [vmem:[%s168 + $0x6c] sm:$0xf]
        %v243 = vld [vmem:[%s168 + $0x70] sm:$0xf]
        %v244 = vld [vmem:[%s168 + $0x74] sm:$0xf]
        %v245 = vld [vmem:[%s168 + $0x78] sm:$0xf]
        %v246 = vld [vmem:[%s168 + $0x7c] sm:$0xf]
        %v247 = vld [vmem:[%s168 + $0x80] sm:$0xf]
        %v248 = vld [vmem:[%s168 + $0x84] sm:$0xf]
        %v249 = vld [vmem:[%s168 + $0x88] sm:$0xf]
        %v250 = vld [vmem:[%s168 + $0x8c] sm:$0xf]
        %v251 = vld [vmem:[%s168 + $0x90] sm:$0xf]
        %v252 = vld [vmem:[%s168 + $0x94] sm:$0xf]
        %v253 = vld [vmem:[%s168 + $0x98] sm:$0xf]
        %v254 = vld [vmem:[%s168 + $0x9c] sm:$0xf]
        %v255 = vld [vmem:[%s168 + $0xa0] sm:$0xf]
        %v256 = vld [vmem:[%s168 + $0xa4] sm:$0xf]
        %v257 = vld [vmem:[%s168 + $0xa8] sm:$0xf]
        %v258 = vld [vmem:[%s168 + $0xac] sm:$0xf]
        %v259 = vld [vmem:[%s168 + $0xb0] sm:$0xf]
        %v260 = vld [vmem:[%s168 + $0xb4] sm:$0xf]
        %v261 = vld [vmem:[%s168 + $0xb8] sm:$0xf]
        %v262 = vld [vmem:[%s168 + $0xbc] sm:$0xf]
        %v264 = vcombine.high %v214, %v214
        %v266 = vunpack.c.l.s4 1983009808
        %v267 = vunpack.c.0.s8 %v266
        %v268 = vlaneseq
        %v269 = vshrl.u32 %v268, 7
        %v270 = vsub.s32 %v267, %v269
        %v271 = vrot.slane %v214, %v270
        %v273 = vunpack.c.l.s4 1983009808
        %v274 = vunpack.c.0.s8 %v273
        %v275 = vlaneseq
        %v276 = vshrl.u32 %v275, 7
        %v277 = vsub.s32 %v274, %v276
        %v278 = vrot.slane %v264, %v277
        %v279 = vcombine.high %v271, %v271
        %v331 = vunpack.c.l.b16 %v215
        %v332 = vunpack.c.l.b16 %v216
        %v333 = vunpack.c.l.b16 %v217
        %v334 = vunpack.c.l.b16 %v218
        %v335 = vunpack.c.l.b16 %v219
        %v336 = vunpack.c.l.b16 %v220
        %v337 = vunpack.c.l.b16 %v221
        %v338 = vunpack.c.l.b16 %v222
        %v339 = vunpack.c.l.b16 %v223
        %v340 = vunpack.c.l.b16 %v224
        %v341 = vunpack.c.l.b16 %v225
        %v342 = vunpack.c.l.b16 %v226
        %v343 = vunpack.c.l.b16 %v227
        %v344 = vunpack.c.l.b16 %v228
        %v345 = vunpack.c.l.b16 %v229
        %v346 = vunpack.c.l.b16 %v230
        %v347 = vunpack.c.l.b16 %v231
        %v348 = vunpack.c.l.b16 %v232
        %v349 = vunpack.c.l.b16 %v233
        %v350 = vunpack.c.l.b16 %v234
        %v351 = vunpack.c.l.b16 %v235
        %v352 = vunpack.c.l.b16 %v236
        %v353 = vunpack.c.l.b16 %v237
        %v354 = vunpack.c.l.b16 %v238
        %v355 = vunpack.c.l.b16 %v239
        %v356 = vunpack.c.l.b16 %v240
        %v357 = vunpack.c.l.b16 %v241
        %v358 = vunpack.c.l.b16 %v242
        %v359 = vunpack.c.l.b16 %v243
        %v360 = vunpack.c.l.b16 %v244
        %v361 = vunpack.c.l.b16 %v245
        %v362 = vunpack.c.l.b16 %v246
        %v363 = vunpack.c.l.b16 %v247
        %v364 = vunpack.c.l.b16 %v248
        %v365 = vunpack.c.l.b16 %v249
        %v366 = vunpack.c.l.b16 %v250
        %v367 = vunpack.c.l.b16 %v251
        %v368 = vunpack.c.l.b16 %v252
        %v369 = vunpack.c.l.b16 %v253
        %v370 = vunpack.c.l.b16 %v254
        %v371 = vunpack.c.l.b16 %v255
        %v372 = vunpack.c.l.b16 %v256
        %v373 = vunpack.c.l.b16 %v257
        %v374 = vunpack.c.l.b16 %v258
        %v375 = vunpack.c.l.b16 %v259
        %v376 = vunpack.c.l.b16 %v260
        %v377 = vunpack.c.l.b16 %v261
        %v378 = vunpack.c.l.b16 %v262
        %v379 = vpack.c.b16 %v332, %v331
        %v380 = vpack.c.b16 %v334, %v333
        %v381 = vpack.c.b16 %v336, %v335
        %v382 = vpack.c.b16 %v338, %v337
        %v383 = vpack.c.b16 %v340, %v339
        %v384 = vpack.c.b16 %v342, %v341
        %v385 = vpack.c.b16 %v344, %v343
        %v386 = vpack.c.b16 %v346, %v345
        %v387 = vpack.c.b16 %v348, %v347
        %v388 = vpack.c.b16 %v350, %v349
        %v389 = vpack.c.b16 %v352, %v351
        %v390 = vpack.c.b16 %v354, %v353
        %v391 = vpack.c.b16 %v356, %v355
        %v392 = vpack.c.b16 %v358, %v357
        %v393 = vpack.c.b16 %v360, %v359
        %v394 = vpack.c.b16 %v362, %v361
        %v395 = vpack.c.b16 %v364, %v363
        %v396 = vpack.c.b16 %v366, %v365
        %v397 = vpack.c.b16 %v368, %v367
        %v398 = vpack.c.b16 %v370, %v369
        %v399 = vpack.c.b16 %v372, %v371
        %v400 = vpack.c.b16 %v374, %v373
        %v401 = vpack.c.b16 %v376, %v375
        %v402 = vpack.c.b16 %v378, %v377
        %427 = vmatprep.subr.bf16.mxu0 0
        %428 = vmatpush1.bf16.msra.mxu0 %v379
        %429 = vmatprep.subr.bf16.mxu0 0
        %430 = vmatpush1.bf16.msra.mxu0 %v380
        %431 = vmatprep.subr.bf16.mxu0 0
        %432 = vmatpush1.bf16.msra.mxu0 %v381
        %433 = vmatprep.subr.bf16.mxu0 0
        %434 = vmatpush1.bf16.msra.mxu0 %v382
        %435 = vmatprep.subr.bf16.mxu0 0
        %436 = vmatpush1.bf16.msra.mxu0 %v383
        %437 = vmatprep.subr.bf16.mxu0 0
        %438 = vmatpush1.bf16.msra.mxu0 %v384
        %439 = vmatprep.subr.bf16.mxu0 0
        %440 = vmatpush1.bf16.msra.mxu0 %v385
        %441 = vmatprep.subr.bf16.mxu0 0
        %442 = vmatpush1.bf16.msra.mxu0 %v386
        %443 = vmatprep.subr.bf16.mxu0 0
        %444 = vmatpush1.bf16.msra.mxu0 %v387
        %445 = vmatprep.subr.bf16.mxu0 0
        %446 = vmatpush1.bf16.msra.mxu0 %v388
        %447 = vmatprep.subr.bf16.mxu0 0
        %448 = vmatpush1.bf16.msra.mxu0 %v389
        %449 = vmatprep.subr.bf16.mxu0 0
        %450 = vmatpush1.bf16.msra.mxu0 %v390
        %451 = vmatprep.subr.bf16.mxu0 0
        %452 = vmatpush1.bf16.msra.mxu0 %v391
        %453 = vmatprep.subr.bf16.mxu0 0
        %454 = vmatpush1.bf16.msra.mxu0 %v392
        %455 = vmatprep.subr.bf16.mxu0 0
        %456 = vmatpush1.bf16.msra.mxu0 %v393
        %457 = vmatprep.subr.bf16.mxu0 0
        %458 = vmatpush1.bf16.msra.mxu0 %v394
        %459 = vmatprep.mubr.bf16.mxu0 %v279
        %460 = vmatmul.mubr.bf16.gmra.mrb[0].mxu0 %v271
        %v461 = vpop.f32.mrb[0].mxu0
        %v462 = vadd.f32 0.0, %v461
        %v463 = vpop.f32.mrb[0].mxu0
        %v464 = vpop.f32.mrb[0].mxu0
        %v465 = vpop.f32.mrb[0].mxu0
        %466 = vdwg.mxu0
        %467 = vmatprep.subr.bf16.mxu0 0
        %468 = vmatpush1.bf16.msra.mxu0 %v395
        %469 = vmatprep.subr.bf16.mxu0 0
        %470 = vmatpush1.bf16.msra.mxu0 %v396
        %471 = vmatprep.subr.bf16.mxu0 0
        %472 = vmatpush1.bf16.msra.mxu0 %v397
        %473 = vmatprep.subr.bf16.mxu0 0
        %474 = vmatpush1.bf16.msra.mxu0 %v398
        %475 = vmatprep.subr.bf16.mxu0 0
        %476 = vmatpush1.bf16.msra.mxu0 %v399
        %477 = vmatprep.subr.bf16.mxu0 0
        %478 = vmatpush1.bf16.msra.mxu0 %v400
        %479 = vmatprep.subr.bf16.mxu0 0
        %480 = vmatpush1.bf16.msra.mxu0 %v401
        %481 = vmatprep.subr.bf16.mxu0 0
        %482 = vmatpush1.bf16.msra.mxu0 %v402
        %483 = vmatprep.subr.bf16.mxu0 0
        %484 = vmatpush1.bf16.msra.mxu0 0
        %485 = vmatprep.subr.bf16.mxu0 0
        %486 = vmatpush1.bf16.msra.mxu0 0
        %487 = vmatprep.subr.bf16.mxu0 0
        %488 = vmatpush1.bf16.msra.mxu0 0
        %489 = vmatprep.subr.bf16.mxu0 0
        %490 = vmatpush1.bf16.msra.mxu0 0
        %491 = vmatprep.subr.bf16.mxu0 0
        %492 = vmatpush1.bf16.msra.mxu0 0
        %493 = vmatprep.subr.bf16.mxu0 0
        %494 = vmatpush1.bf16.msra.mxu0 0
        %495 = vmatprep.subr.bf16.mxu0 0
        %496 = vmatpush1.bf16.msra.mxu0 0
        %497 = vmatprep.subr.bf16.mxu0 0
        %498 = vmatpush1.bf16.msra.mxu0 0
        %499 = vmatprep.mubr.bf16.mxu0 0
        %500 = vmatmul.mubr.bf16.gmra.mrb[0].mxu0 %v278
        %v501 = vpop.f32.mrb[0].mxu0
        %v502 = vadd.f32 %v462, %v501
        %v503 = vpop.f32.mrb[0].mxu0
        %v504 = vpop.f32.mrb[0].mxu0
        %v505 = vpop.f32.mrb[0].mxu0
        %506 = vdwg.mxu0
        %v507 = vld [vmem:[%s207] sm:$0xf]
        %v508 = vadd.f32 %v507, %v502
        %509 = vst [vmem:[%s207] sm:$0xf] %v508
        %p510 = scmp.lt.s32.totalorder %s20, 1
        %s511 = scalar_select %p510, %s20, 1
        %s512 = smul.addr %s511, 4
        %s513 = scalar_lea.vmem %s2, %s512
        // Predicated region
        $region37: #{patch_attack_forward.3} parent=27 // pred_check
          %p514 = pneg %p102
        $region38: #{patch_attack_forward.3} parent=27 // pred_check_branch
          %516 = sbr.rel (%p514) target = $region40
        $region39: #{patch_attack_forward.3} parent=27 // pred_region
          _
        $region40: #{patch_attack_forward.3} parent=27 // pred_fallthru
          _
      $region28: #{patch_attack_forward.3} parent=5 // pred_fallthru
        _
      %p517 = scmp.le.s32.totalorder 2, %s11
      // Predicated region
      $region41: #{patch_attack_forward.3} parent=5 // pred_check
        %p518 = pneg %p517
      $region42: #{patch_attack_forward.3} parent=5 // pred_check_branch
        %520 = sbr.rel (%p518) target = $region44
      $region43: #{patch_attack_forward.3} parent=5 // pred_region
        %s521 = ssub.s32 %s11, 2
        // Predicated region
        $region45: #{patch_attack_forward.3} parent=43 // pred_check
          %p522 = pneg %p108
        $region46: #{patch_attack_forward.3} parent=43 // pred_check_branch
          %524 = sbr.rel (%p522) target = $region48
        $region47: #{patch_attack_forward.3} parent=43 // pred_region
          %p525 = scmp.lt.s32.totalorder %s22, 1
          %s526 = scalar_select %p525, %s22, 1
          %s527 = smul.addr %s526, 4
          %s528 = scalar_lea.vmem %s2, %s527
        $region48: #{patch_attack_forward.3} parent=43 // pred_fallthru
          _
      $region44: #{patch_attack_forward.3} parent=5 // pred_fallthru
        _
    $region6: #{patch_attack_forward.3} parent=1 // loop_footer
      %s15 = sadd.s32 1, %s11
    $region7: #{patch_attack_forward.3} parent=1 // loop_footer_branch
      %10 = sbr.rel target = $region3
    $region8: #{patch_attack_forward.3} parent=1 // loop_exit
      _
    %529 = vsyncpa [#allocation3], 1
    %s530 = scalar_lea.sflag [#allocation3], 1
    %531 = vsyncpa %s530, 1

</llo_original>
